<compile_context>
chip_gen: v7x
topology: tpu7x:2x2x1
jax: 0.10.0
libtpu: 0.0.40
codegen_flags: <defaults>
</compile_context>

<pallas_src>
import functools

import jax
import jax.numpy as jnp
from jax import lax
from jax.experimental import pallas as pl
from jax.experimental.pallas import tpu as pltpu


# ----------------------------------------------------------------------------
# wrapper-side weight preprocessing
# ----------------------------------------------------------------------------
def _fold_bn_bias(gamma, beta, mean, var, bias, eps=1e-5):
    """Fold conv bias + inference BN into per-channel scale/shift."""
    scale = gamma / jnp.sqrt(var + eps)
    shift = (bias - mean) * scale + beta
    return scale.astype(jnp.float32), shift.astype(jnp.float32)


def _conv3_toeplitz(w_hwio, w_in, w_out, stride):
    """(3,3,Cin,Cout) -> (3, w_in*Cin, w_out*Cout) band matrices.

    M[dy, wi*Cin+ci, wo*Cout+co] = w[dy,dx,ci,co]  iff  wi == wo*stride+dx-1
    Horizontal zero-padding (padding=1) is baked in (out-of-range wi dropped).
    """
    kh, kw, cin, cout = w_hwio.shape
    wi = jnp.arange(w_in)
    wo = jnp.arange(w_out)
    m = jnp.zeros((kh, w_in, cin, w_out, cout), jnp.float32)
    for dx in range(kw):
        src = wo * stride + dx - 1                      # input column per output col
        valid = (src >= 0) & (src < w_in)
        onehot = ((wi[:, None] == src[None, :]) & valid[None, :]).astype(jnp.float32)
        m = m + jnp.einsum("iw,dcf->dicwf", onehot,
                           w_hwio[:, dx, :, :].astype(jnp.float32))
    return m.reshape(kh, w_in * cin, w_out * cout)


def _conv1x1_toeplitz(w_io, w_in, w_out, stride):
    """(Cin,Cout) 1x1/stride-s conv -> (w_in*Cin, w_out*Cout) band matrix."""
    cin, cout = w_io.shape
    wi = jnp.arange(w_in)
    wo = jnp.arange(w_out)
    onehot = (wi[:, None] == (wo * stride)[None, :]).astype(jnp.float32)
    m = jnp.einsum("iw,cf->icwf", onehot, w_io.astype(jnp.float32))
    return m.reshape(w_in * cin, w_out * cout)


# ----------------------------------------------------------------------------
# kernel
# ----------------------------------------------------------------------------
def _inner_block_kernel(x_ref, m1_ref, s1_ref, t1_ref,
                        m2_ref, s2_ref, t2_ref,
                        msc_ref, bsc_ref, alpha_ref,
                        out_ref, acc_ref, *, stride, identity):
    hout = out_ref.shape[1]
    wc = out_ref.shape[2]          # Wout * Cout  (lane-dense)
    k1 = x_ref.shape[2]            # W * Cin

    x2d = x_ref[0]                 # (H+2, W*Cin) bf16, vertically zero-padded
    alpha = alpha_ref[0]

    def prelu(v):
        return jnp.where(v >= 0.0, v, alpha * v)

    # ---- conv1 + BN1 + PReLU: 3 wide matmuls (K = W*Cin, N = Wout*Cout) ----
    h1 = jnp.zeros((hout, wc), jnp.float32)
    for dy in range(3):
        rows = lax.slice(x2d, (dy, 0),
                         (dy + (hout - 1) * stride + 1, k1), (stride, 1))
        h1 = h1 + jnp.dot(rows, m1_ref[dy], preferred_element_type=jnp.float32)
    h1 = prelu(h1 * s1_ref[...] + t1_ref[...])      # bias folded into shift
    h1b = h1.astype(jnp.bfloat16)

    # ---- conv2 (stride 1, pad 1): horizontal pad lives inside m2; vertical
    #      pad handled by row-shifted accumulation into a lane-dense scratch --
    acc_ref[...] = jnp.dot(h1b, m2_ref[1], preferred_element_type=jnp.float32)
    if hout > 1:
        acc_ref[1:hout, :] = acc_ref[1:hout, :] + jnp.dot(
            h1b[0:hout - 1, :], m2_ref[0], preferred_element_type=jnp.float32)
        acc_ref[0:hout - 1, :] = acc_ref[0:hout - 1, :] + jnp.dot(
            h1b[1:hout, :], m2_ref[2], preferred_element_type=jnp.float32)
    h2 = acc_ref[...] * s2_ref[...] + t2_ref[...]

    # ---- shortcut ----
    if identity:
        sc = x2d[1:1 + hout, :].astype(jnp.float32)
    else:
        # TODO(synk): for stride=2, pre-split rows into even/odd phases to keep
        # the slice unit-stride.
        rows = lax.slice(x2d, (1, 0),
                         (1 + (hout - 1) * stride + 1, k1), (stride, 1))
        sc = jnp.dot(rows, msc_ref[...],
                     preferred_element_type=jnp.float32) + bsc_ref[...]

    out_ref[...] = prelu(sc + h2).reshape(1, hout, wc)


# ----------------------------------------------------------------------------
# wrapper
# ----------------------------------------------------------------------------
def inner_block(x_nchw, params, *, stride):
    """Pallas forward of InnerBlock.  Input/output are NCHW like PyTorch."""
    x = jnp.transpose(x_nchw, (0, 2, 3, 1)).astype(jnp.float32)   # NHWC
    N, H, W, Cin = x.shape
    Cout = params["w1"].shape[-1]
    Hout = (H + 2 - 3) // stride + 1
    Wout = (W + 2 - 3) // stride + 1
    identity = (stride == 1 and Cin == Cout)
    K1 = W * Cin
    WC = Wout * Cout

    # vertical zero-pad only (horizontal pad is inside the band matrices),
    # flatten (W, Cin) onto the lane axis, cast activations to bf16.
    x_pad = jnp.pad(x, ((0, 0), (1, 1), (0, 0), (0, 0)))
    x2d = x_pad.reshape(N, H + 2, K1).astype(jnp.bfloat16)

    # fold bias + BN into lane-dense scale/shift vectors (tiled over Wout)
    s1, t1 = _fold_bn_bias(params["bn1_gamma"], params["bn1_beta"],
                           params["bn1_mean"], params["bn1_var"], params["b1"])
    s2, t2 = _fold_bn_bias(params["bn2_gamma"], params["bn2_beta"],
                           params["bn2_mean"], params["bn2_var"], params["b2"])

    def tile_c(v):
        return jnp.tile(v.astype(jnp.float32), Wout).reshape(1, WC)

    s1t, t1t = tile_c(s1), tile_c(t1)
    s2t, t2t = tile_c(s2), tile_c(t2)
    bsct = tile_c(params["bsc"])

    # band (block-Toeplitz) weight matrices, bf16 (in real use: precompute once)
    m1 = _conv3_toeplitz(params["w1"], W, Wout, stride).astype(jnp.bfloat16)
    m2 = _conv3_toeplitz(params["w2"], Wout, Wout, 1).astype(jnp.bfloat16)
    msc = _conv1x1_toeplitz(params["wsc"], W, Wout, stride).astype(jnp.bfloat16)

    def full_spec(shape):
        zeros = (0,) * len(shape)
        return pl.BlockSpec(shape, lambda n, z=zeros: z)

    grid_spec = pltpu.PrefetchScalarGridSpec(
        num_scalar_prefetch=0,
        grid=(N,),
        in_specs=[
            pl.BlockSpec((1, H + 2, K1), lambda n: (n, 0, 0)),   # x2d
            full_spec((3, K1, WC)),     # conv1 band matrices
            full_spec((1, WC)),         # bn1 scale (tiled)
            full_spec((1, WC)),         # bn1 shift (bias folded, tiled)
            full_spec((3, WC, WC)),     # conv2 band matrices
            full_spec((1, WC)),         # bn2 scale
            full_spec((1, WC)),         # bn2 shift
            full_spec((K1, WC)),        # shortcut 1x1 band matrix
            full_spec((1, WC)),         # shortcut bias (tiled)
            pl.BlockSpec(memory_space=pltpu.MemorySpace.SMEM),   # prelu alpha
        ],
        out_specs=pl.BlockSpec((1, Hout, WC), lambda n: (n, 0, 0)),
        scratch_shapes=[pltpu.VMEM((Hout, WC), jnp.float32)],
    )

    kern = functools.partial(_inner_block_kernel, stride=stride, identity=identity)
    out = pl.pallas_call(
        kern,
        out_shape=jax.ShapeDtypeStruct((N, Hout, WC), jnp.float32),
        grid_spec=grid_spec,
        compiler_params=pltpu.CompilerParams(dimension_semantics=("parallel",)),
    )(x2d, m1, s1t, t1t, m2, s2t, t2t, msc, bsct, params["alpha"])

    out = out.reshape(N, Hout, Wout, Cout)
    return jnp.transpose(out, (0, 3, 1, 2))   # back to NCHW


# ----------------------------------------------------------------------------
# params + pure-JAX reference
# ----------------------------------------------------------------------------
def init_params(key, cin, cout):
    ks = jax.random.split(key, 16)

    def kaiming(k, shape, fan_out):
        return (jax.random.normal(k, shape) * jnp.sqrt(2.0 / fan_out)).astype(jnp.float32)

    p = {}
    p["w1"] = kaiming(ks[0], (3, 3, cin, cout), cout * 9)
    p["b1"] = 0.05 * jax.random.normal(ks[1], (cout,), jnp.float32)
    p["w2"] = kaiming(ks[2], (3, 3, cout, cout), cout * 9)
    p["b2"] = 0.05 * jax.random.normal(ks[3], (cout,), jnp.float32)
    p["wsc"] = kaiming(ks[4], (cin, cout), cout)         # 1x1 conv
    p["bsc"] = 0.05 * jax.random.normal(ks[5], (cout,), jnp.float32)
    p["bn1_gamma"] = 1.0 + 0.1 * jax.random.normal(ks[6], (cout,), jnp.float32)
    p["bn1_beta"] = 0.1 * jax.random.normal(ks[7], (cout,), jnp.float32)
    p["bn1_mean"] = 0.1 * jax.random.normal(ks[8], (cout,), jnp.float32)
    p["bn1_var"] = 1.0 + 0.1 * jnp.abs(jax.random.normal(ks[9], (cout,), jnp.float32))
    p["bn2_gamma"] = 1.0 + 0.1 * jax.random.normal(ks[10], (cout,), jnp.float32)
    p["bn2_beta"] = 0.1 * jax.random.normal(ks[11], (cout,), jnp.float32)
    p["bn2_mean"] = 0.1 * jax.random.normal(ks[12], (cout,), jnp.float32)
    p["bn2_var"] = 1.0 + 0.1 * jnp.abs(jax.random.normal(ks[13], (cout,), jnp.float32))
    p["alpha"] = jnp.array([0.25], jnp.float32)          # nn.PReLU() single parameter
    return p


def reference_forward(x_nchw, params, *, stride):
    """Pure-JAX reference (lax.conv, f32 HIGHEST) mirroring the PyTorch forward."""
    dn = ("NHWC", "HWIO", "NHWC")
    x = jnp.transpose(x_nchw, (0, 2, 3, 1)).astype(jnp.float32)
    cin, cout = x.shape[-1], params["w1"].shape[-1]
    identity = (stride == 1 and cin == cout)
    alpha = params["alpha"][0]
    prelu = lambda v: jnp.where(v >= 0.0, v, alpha * v)

    def bn(v, g, b, m, var, eps=1e-5):
        return (v - m) / jnp.sqrt(var + eps) * g + b

    h = lax.conv_general_dilated(x, params["w1"], (stride, stride), ((1, 1), (1, 1)),
                                 dimension_numbers=dn,
                                 precision=lax.Precision.HIGHEST) + params["b1"]
    h = prelu(bn(h, params["bn1_gamma"], params["bn1_beta"],
                 params["bn1_mean"], params["bn1_var"]))
    h2 = lax.conv_general_dilated(h, params["w2"], (1, 1), ((1, 1), (1, 1)),
                                  dimension_numbers=dn,
                                  precision=lax.Precision.HIGHEST) + params["b2"]
    h2 = bn(h2, params["bn2_gamma"], params["bn2_beta"],
            params["bn2_mean"], params["bn2_var"])
    if identity:
        sc = x
    else:
        wsc4 = params["wsc"].reshape(1, 1, cin, cout)
        sc = lax.conv_general_dilated(x, wsc4, (stride, stride), ((0, 0), (0, 0)),
                                      dimension_numbers=dn,
                                      precision=lax.Precision.HIGHEST) + params["bsc"]
    return jnp.transpose(prelu(sc + h2), (0, 3, 1, 2))


if __name__ == "__main__":
    N, Cin, Cout, H, W, stride = 2, 8, 16, 16, 16, 1

    key = jax.random.PRNGKey(0)
    kx, kp = jax.random.split(key)
    x = jax.random.normal(kx, (N, Cin, H, W), jnp.float32)
    params = init_params(kp, Cin, Cout)

    out = inner_block(x, params, stride=stride)
    out = jax.block_until_ready(out)

    ref = reference_forward(x, params, stride=stride)
    Hout = (H + 2 - 3) // stride + 1
    Wout = (W + 2 - 3) // stride + 1
    assert out.shape == ref.shape == (N, Cout, Hout, Wout), out.shape
    max_err = float(jnp.max(jnp.abs(out - ref)))
    # bf16 matmul operands (f32 accumulation) vs f32-HIGHEST reference.
    assert max_err < 5e-2, f"max abs error too large: {max_err}"

    print("KERNEL_OK")
</pallas_src>

<mosaic_0001>
module attributes {stable_mosaic.version = 11 : i64} {
  func.func @_inner_block_kernel(%arg0: i32, %arg1: memref<1x18x128xbf16, #tpu.memory_space<vmem>>, %arg2: memref<3x128x256xbf16, #tpu.memory_space<vmem>>, %arg3: memref<1x256xf32, #tpu.memory_space<vmem>>, %arg4: memref<1x256xf32, #tpu.memory_space<vmem>>, %arg5: memref<3x256x256xbf16, #tpu.memory_space<vmem>>, %arg6: memref<1x256xf32, #tpu.memory_space<vmem>>, %arg7: memref<1x256xf32, #tpu.memory_space<vmem>>, %arg8: memref<128x256xbf16, #tpu.memory_space<vmem>>, %arg9: memref<1x256xf32, #tpu.memory_space<vmem>>, %arg10: memref<1xf32, #tpu.memory_space<smem>>, %arg11: memref<1x16x256xf32, #tpu.memory_space<vmem>>, %arg12: memref<16x256xf32, #tpu.memory_space<vmem>>) attributes {dimension_semantics = [#tpu.dimension_semantics<parallel>], iteration_bounds = array<i64: 2>, scalar_prefetch = 0 : i64, scratch_operands = 1 : i64, tpu.core_type = #tpu.core_type<tc>, window_params = [{transform_indices = @transform_0, window_bounds = array<i64: 1, 18, 128>}, {pipeline_mode = #tpu.pipeline_mode<synchronous>, transform_indices = @transform_1, window_bounds = array<i64: 3, 128, 256>}, {pipeline_mode = #tpu.pipeline_mode<synchronous>, transform_indices = @transform_2, window_bounds = array<i64: 1, 256>}, {pipeline_mode = #tpu.pipeline_mode<synchronous>, transform_indices = @transform_3, window_bounds = array<i64: 1, 256>}, {pipeline_mode = #tpu.pipeline_mode<synchronous>, transform_indices = @transform_4, window_bounds = array<i64: 3, 256, 256>}, {pipeline_mode = #tpu.pipeline_mode<synchronous>, transform_indices = @transform_5, window_bounds = array<i64: 1, 256>}, {pipeline_mode = #tpu.pipeline_mode<synchronous>, transform_indices = @transform_6, window_bounds = array<i64: 1, 256>}, {pipeline_mode = #tpu.pipeline_mode<synchronous>, transform_indices = @transform_7, window_bounds = array<i64: 128, 256>}, {pipeline_mode = #tpu.pipeline_mode<synchronous>, transform_indices = @transform_8, window_bounds = array<i64: 1, 256>}, {transform_indices = @transform_9, window_bounds = array<i64: 1>}, {transform_indices = @transform_10, window_bounds = array<i64: 1, 16, 256>}]} {
    %c0 = arith.constant 0 : index
    %c0_0 = arith.constant 0 : index
    %c0_1 = arith.constant 0 : index
    %0 = vector.load %arg1[%c0, %c0_0, %c0_1] : memref<1x18x128xbf16, #tpu.memory_space<vmem>>, vector<1x18x128xbf16>
    %1 = vector.shape_cast %0 : vector<1x18x128xbf16> to vector<18x128xbf16>
    %c0_2 = arith.constant 0 : index
    %2 = memref.load %arg10[%c0_2] : memref<1xf32, #tpu.memory_space<smem>>
    %cst = arith.constant 0.000000e+00 : f32
    %3 = vector.broadcast %cst : f32 to vector<16x256xf32>
    %4 = vector.extract_strided_slice %1 {offsets = [0, 0], sizes = [16, 128], strides = [1, 1]} : vector<18x128xbf16> to vector<16x128xbf16>
    %c0_3 = arith.constant 0 : index
    %c0_4 = arith.constant 0 : index
    %c0_5 = arith.constant 0 : index
    %5 = vector.load %arg2[%c0_3, %c0_4, %c0_5] : memref<3x128x256xbf16, #tpu.memory_space<vmem>>, vector<1x128x256xbf16>
    %6 = vector.shape_cast %5 : vector<1x128x256xbf16> to vector<128x256xbf16>
    %cst_6 = arith.constant dense<0.000000e+00> : vector<16x256xf32>
    %7 = tpu.matmul %4, %6, %cst_6 {dimension_numbers = #tpu.dot_dimension_numbers<[1], [0], [0], [1], [0, 0, 1, 1], [], []>} : vector<16x128xbf16>, vector<128x256xbf16>, vector<16x256xf32> -> vector<16x256xf32>
    %8 = arith.addf %3, %7 : vector<16x256xf32>
    %9 = vector.extract_strided_slice %1 {offsets = [1, 0], sizes = [16, 128], strides = [1, 1]} : vector<18x128xbf16> to vector<16x128xbf16>
    %c1 = arith.constant 1 : index
    %c0_7 = arith.constant 0 : index
    %c0_8 = arith.constant 0 : index
    %10 = vector.load %arg2[%c1, %c0_7, %c0_8] : memref<3x128x256xbf16, #tpu.memory_space<vmem>>, vector<1x128x256xbf16>
    %11 = vector.shape_cast %10 : vector<1x128x256xbf16> to vector<128x256xbf16>
    %cst_9 = arith.constant dense<0.000000e+00> : vector<16x256xf32>
    %12 = tpu.matmul %9, %11, %cst_9 {dimension_numbers = #tpu.dot_dimension_numbers<[1], [0], [0], [1], [0, 0, 1, 1], [], []>} : vector<16x128xbf16>, vector<128x256xbf16>, vector<16x256xf32> -> vector<16x256xf32>
    %13 = arith.addf %8, %12 : vector<16x256xf32>
    %14 = vector.extract_strided_slice %1 {offsets = [2, 0], sizes = [16, 128], strides = [1, 1]} : vector<18x128xbf16> to vector<16x128xbf16>
    %c2 = arith.constant 2 : index
    %c0_10 = arith.constant 0 : index
    %c0_11 = arith.constant 0 : index
    %15 = vector.load %arg2[%c2, %c0_10, %c0_11] : memref<3x128x256xbf16, #tpu.memory_space<vmem>>, vector<1x128x256xbf16>
    %16 = vector.shape_cast %15 : vector<1x128x256xbf16> to vector<128x256xbf16>
    %cst_12 = arith.constant dense<0.000000e+00> : vector<16x256xf32>
    %17 = tpu.matmul %14, %16, %cst_12 {dimension_numbers = #tpu.dot_dimension_numbers<[1], [0], [0], [1], [0, 0, 1, 1], [], []>} : vector<16x128xbf16>, vector<128x256xbf16>, vector<16x256xf32> -> vector<16x256xf32>
    %18 = arith.addf %13, %17 : vector<16x256xf32>
    %c0_13 = arith.constant 0 : index
    %c0_14 = arith.constant 0 : index
    %19 = vector.load %arg3[%c0_13, %c0_14] : memref<1x256xf32, #tpu.memory_space<vmem>>, vector<1x256xf32>
    %20 = vector.broadcast %19 : vector<1x256xf32> to vector<16x256xf32>
    %21 = arith.mulf %18, %20 : vector<16x256xf32>
    %c0_15 = arith.constant 0 : index
    %c0_16 = arith.constant 0 : index
    %22 = vector.load %arg4[%c0_15, %c0_16] : memref<1x256xf32, #tpu.memory_space<vmem>>, vector<1x256xf32>
    %23 = vector.broadcast %22 : vector<1x256xf32> to vector<16x256xf32>
    %24 = arith.addf %21, %23 : vector<16x256xf32>
    %cst_17 = arith.constant 0.000000e+00 : f32
    %25 = vector.broadcast %cst_17 : f32 to vector<16x256xf32>
    %26 = arith.cmpf oge, %24, %25 : vector<16x256xf32>
    %27 = vector.broadcast %2 : f32 to vector<16x256xf32>
    %28 = arith.mulf %27, %24 : vector<16x256xf32>
    %29 = arith.select %26, %24, %28 : vector<16x256xi1>, vector<16x256xf32>
    %30 = arith.truncf %29 : vector<16x256xf32> to vector<16x256xbf16>
    %c1_18 = arith.constant 1 : index
    %c0_19 = arith.constant 0 : index
    %c0_20 = arith.constant 0 : index
    %31 = vector.load %arg5[%c1_18, %c0_19, %c0_20] : memref<3x256x256xbf16, #tpu.memory_space<vmem>>, vector<1x256x256xbf16>
    %32 = vector.shape_cast %31 : vector<1x256x256xbf16> to vector<256x256xbf16>
    %cst_21 = arith.constant dense<0.000000e+00> : vector<16x256xf32>
    %33 = tpu.matmul %30, %32, %cst_21 {dimension_numbers = #tpu.dot_dimension_numbers<[1], [0], [0], [1], [0, 0, 1, 1], [], []>} : vector<16x256xbf16>, vector<256x256xbf16>, vector<16x256xf32> -> vector<16x256xf32>
    %c0_22 = arith.constant 0 : index
    %c0_23 = arith.constant 0 : index
    %34 = vector.load %arg12[%c0_22, %c0_23] : memref<16x256xf32, #tpu.memory_space<vmem>>, vector<16x256xf32>
    tpu.vector_store %arg12[%c0_22, %c0_23], %33 {strides = array<i32>} : memref<16x256xf32, #tpu.memory_space<vmem>>, vector<16x256xf32>,
    %c1_24 = arith.constant 1 : index
    %c0_25 = arith.constant 0 : index
    %35 = vector.load %arg12[%c1_24, %c0_25] : memref<16x256xf32, #tpu.memory_space<vmem>>, vector<15x256xf32>
    %36 = vector.extract_strided_slice %30 {offsets = [0, 0], sizes = [15, 256], strides = [1, 1]} : vector<16x256xbf16> to vector<15x256xbf16>
    %c0_26 = arith.constant 0 : index
    %c0_27 = arith.constant 0 : index
    %c0_28 = arith.constant 0 : index
    %37 = vector.load %arg5[%c0_26, %c0_27, %c0_28] : memref<3x256x256xbf16, #tpu.memory_space<vmem>>, vector<1x256x256xbf16>
    %38 = vector.shape_cast %37 : vector<1x256x256xbf16> to vector<256x256xbf16>
    %cst_29 = arith.constant dense<0.000000e+00> : vector<15x256xf32>
    %39 = tpu.matmul %36, %38, %cst_29 {dimension_numbers = #tpu.dot_dimension_numbers<[1], [0], [0], [1], [0, 0, 1, 1], [], []>} : vector<15x256xbf16>, vector<256x256xbf16>, vector<15x256xf32> -> vector<15x256xf32>
    %40 = arith.addf %35, %39 : vector<15x256xf32>
    %c1_30 = arith.constant 1 : index
    %c0_31 = arith.constant 0 : index
    %41 = vector.load %arg12[%c1_30, %c0_31] : memref<16x256xf32, #tpu.memory_space<vmem>>, vector<15x256xf32>
    tpu.vector_store %arg12[%c1_30, %c0_31], %40 {strides = array<i32>} : memref<16x256xf32, #tpu.memory_space<vmem>>, vector<15x256xf32>,
    %c0_32 = arith.constant 0 : index
    %c0_33 = arith.constant 0 : index
    %42 = vector.load %arg12[%c0_32, %c0_33] : memref<16x256xf32, #tpu.memory_space<vmem>>, vector<15x256xf32>
    %43 = vector.extract_strided_slice %30 {offsets = [1, 0], sizes = [15, 256], strides = [1, 1]} : vector<16x256xbf16> to vector<15x256xbf16>
    %c2_34 = arith.constant 2 : index
    %c0_35 = arith.constant 0 : index
    %c0_36 = arith.constant 0 : index
    %44 = vector.load %arg5[%c2_34, %c0_35, %c0_36] : memref<3x256x256xbf16, #tpu.memory_space<vmem>>, vector<1x256x256xbf16>
    %45 = vector.shape_cast %44 : vector<1x256x256xbf16> to vector<256x256xbf16>
    %cst_37 = arith.constant dense<0.000000e+00> : vector<15x256xf32>
    %46 = tpu.matmul %43, %45, %cst_37 {dimension_numbers = #tpu.dot_dimension_numbers<[1], [0], [0], [1], [0, 0, 1, 1], [], []>} : vector<15x256xbf16>, vector<256x256xbf16>, vector<15x256xf32> -> vector<15x256xf32>
    %47 = arith.addf %42, %46 : vector<15x256xf32>
    %c0_38 = arith.constant 0 : index
    %c0_39 = arith.constant 0 : index
    %48 = vector.load %arg12[%c0_38, %c0_39] : memref<16x256xf32, #tpu.memory_space<vmem>>, vector<15x256xf32>
    tpu.vector_store %arg12[%c0_38, %c0_39], %47 {strides = array<i32>} : memref<16x256xf32, #tpu.memory_space<vmem>>, vector<15x256xf32>,
    %c0_40 = arith.constant 0 : index
    %c0_41 = arith.constant 0 : index
    %49 = vector.load %arg12[%c0_40, %c0_41] : memref<16x256xf32, #tpu.memory_space<vmem>>, vector<16x256xf32>
    %c0_42 = arith.constant 0 : index
    %c0_43 = arith.constant 0 : index
    %50 = vector.load %arg6[%c0_42, %c0_43] : memref<1x256xf32, #tpu.memory_space<vmem>>, vector<1x256xf32>
    %51 = vector.broadcast %50 : vector<1x256xf32> to vector<16x256xf32>
    %52 = arith.mulf %49, %51 : vector<16x256xf32>
    %c0_44 = arith.constant 0 : index
    %c0_45 = arith.constant 0 : index
    %53 = vector.load %arg7[%c0_44, %c0_45] : memref<1x256xf32, #tpu.memory_space<vmem>>, vector<1x256xf32>
    %54 = vector.broadcast %53 : vector<1x256xf32> to vector<16x256xf32>
    %55 = arith.addf %52, %54 : vector<16x256xf32>
    %56 = vector.extract_strided_slice %1 {offsets = [1, 0], sizes = [16, 128], strides = [1, 1]} : vector<18x128xbf16> to vector<16x128xbf16>
    %c0_46 = arith.constant 0 : index
    %c0_47 = arith.constant 0 : index
    %57 = vector.load %arg8[%c0_46, %c0_47] : memref<128x256xbf16, #tpu.memory_space<vmem>>, vector<128x256xbf16>
    %cst_48 = arith.constant dense<0.000000e+00> : vector<16x256xf32>
    %58 = tpu.matmul %56, %57, %cst_48 {dimension_numbers = #tpu.dot_dimension_numbers<[1], [0], [0], [1], [0, 0, 1, 1], [], []>} : vector<16x128xbf16>, vector<128x256xbf16>, vector<16x256xf32> -> vector<16x256xf32>
    %c0_49 = arith.constant 0 : index
    %c0_50 = arith.constant 0 : index
    %59 = vector.load %arg9[%c0_49, %c0_50] : memref<1x256xf32, #tpu.memory_space<vmem>>, vector<1x256xf32>
    %60 = vector.broadcast %59 : vector<1x256xf32> to vector<16x256xf32>
    %61 = arith.addf %58, %60 : vector<16x256xf32>
    %62 = arith.addf %61, %55 : vector<16x256xf32>
    %cst_51 = arith.constant 0.000000e+00 : f32
    %63 = vector.broadcast %cst_51 : f32 to vector<16x256xf32>
    %64 = arith.cmpf oge, %62, %63 : vector<16x256xf32>
    %65 = vector.broadcast %2 : f32 to vector<16x256xf32>
    %66 = arith.mulf %65, %62 : vector<16x256xf32>
    %67 = arith.select %64, %62, %66 : vector<16x256xi1>, vector<16x256xf32>
    %68 = vector.shape_cast %67 : vector<16x256xf32> to vector<1x16x256xf32>
    %c0_52 = arith.constant 0 : index
    %c0_53 = arith.constant 0 : index
    %c0_54 = arith.constant 0 : index
    %69 = vector.load %arg11[%c0_52, %c0_53, %c0_54] : memref<1x16x256xf32, #tpu.memory_space<vmem>>, vector<1x16x256xf32>
    tpu.vector_store %arg11[%c0_52, %c0_53, %c0_54], %68 {strides = array<i32>} : memref<1x16x256xf32, #tpu.memory_space<vmem>>, vector<1x16x256xf32>,
    return
  }
  func.func @transform_0(%arg0: i32) -> (i32, i32, i32) {
    %c0_i32 = arith.constant 0 : i32
    %c0_i32_0 = arith.constant 0 : i32
    %c0_i32_1 = arith.constant 0 : i32
    return %arg0, %c0_i32, %c0_i32_0 : i32, i32, i32
  }
  func.func @transform_1(%arg0: i32) -> (i32, i32, i32) {
    %c0_i32 = arith.constant 0 : i32
    %c0_i32_0 = arith.constant 0 : i32
    %c0_i32_1 = arith.constant 0 : i32
    %c0_i32_2 = arith.constant 0 : i32
    return %c0_i32, %c0_i32_0, %c0_i32_1 : i32, i32, i32
  }
  func.func @transform_2(%arg0: i32) -> (i32, i32) {
    %c0_i32 = arith.constant 0 : i32
    %c0_i32_0 = arith.constant 0 : i32
    %c0_i32_1 = arith.constant 0 : i32
    return %c0_i32, %c0_i32_0 : i32, i32
  }
  func.func @transform_3(%arg0: i32) -> (i32, i32) {
    %c0_i32 = arith.constant 0 : i32
    %c0_i32_0 = arith.constant 0 : i32
    %c0_i32_1 = arith.constant 0 : i32
    return %c0_i32, %c0_i32_0 : i32, i32
  }
  func.func @transform_4(%arg0: i32) -> (i32, i32, i32) {
    %c0_i32 = arith.constant 0 : i32
    %c0_i32_0 = arith.constant 0 : i32
    %c0_i32_1 = arith.constant 0 : i32
    %c0_i32_2 = arith.constant 0 : i32
    return %c0_i32, %c0_i32_0, %c0_i32_1 : i32, i32, i32
  }
  func.func @transform_5(%arg0: i32) -> (i32, i32) {
    %c0_i32 = arith.constant 0 : i32
    %c0_i32_0 = arith.constant 0 : i32
    %c0_i32_1 = arith.constant 0 : i32
    return %c0_i32, %c0_i32_0 : i32, i32
  }
  func.func @transform_6(%arg0: i32) -> (i32, i32) {
    %c0_i32 = arith.constant 0 : i32
    %c0_i32_0 = arith.constant 0 : i32
    %c0_i32_1 = arith.constant 0 : i32
    return %c0_i32, %c0_i32_0 : i32, i32
  }
  func.func @transform_7(%arg0: i32) -> (i32, i32) {
    %c0_i32 = arith.constant 0 : i32
    %c0_i32_0 = arith.constant 0 : i32
    %c0_i32_1 = arith.constant 0 : i32
    return %c0_i32, %c0_i32_0 : i32, i32
  }
  func.func @transform_8(%arg0: i32) -> (i32, i32) {
    %c0_i32 = arith.constant 0 : i32
    %c0_i32_0 = arith.constant 0 : i32
    %c0_i32_1 = arith.constant 0 : i32
    return %c0_i32, %c0_i32_0 : i32, i32
  }
  func.func @transform_9(%arg0: i32) -> i32 {
    %c0_i32 = arith.constant 0 : i32
    %c0_i32_0 = arith.constant 0 : i32
    return %c0_i32 : i32
  }
  func.func @transform_10(%arg0: i32) -> (i32, i32, i32) {
    %c0_i32 = arith.constant 0 : i32
    %c0_i32_0 = arith.constant 0 : i32
    %c0_i32_1 = arith.constant 0 : i32
    return %arg0, %c0_i32, %c0_i32_0 : i32, i32, i32
  }
}

</mosaic_0001>

<llo_original>
// kernel: tpu_custom_call.1
$region0: #{tpu_custom_call.1}
  #allocation0 [shape = 'u32[]', space=smem, size = 0x4, offset = 0x4, fixed_abs, tag = 'smem constant byte address 0x4 - core index']
  #allocation1 [shape = 'u32[144,128]{1,0:T(1,128)}', space=vmem, size = 0x12000, scoped, tag = 'internal scratch']
  #allocation2 [shape = 'f32[16,256]{1,0:T(8,128)}', space=vmem, size = 0x4000, scoped, tag = 'scratch operand']
  #allocation3 [shape = 'f32[1]{0:T(128)S(6)}', space=smem, size = 0x200, scoped, tag = 'scoped memory for tpu_custom_call.1']
  %s0 = inlined_call_operand.vmem [shape: bf16[2,18,128], index: 0, kind: input, shape index: {}]
  %s1 = inlined_call_operand.hbm [shape: bf16[3,128,256], index: 1, kind: input, shape index: {}]
  %s2 = inlined_call_operand.vmem [shape: f32[1,256], index: 2, kind: input, shape index: {}]
  %s3 = inlined_call_operand.vmem [shape: f32[1,256], index: 3, kind: input, shape index: {}]
  %s4 = inlined_call_operand.hbm [shape: bf16[3,256,256], index: 4, kind: input, shape index: {}]
  %s5 = inlined_call_operand.vmem [shape: f32[1,256], index: 5, kind: input, shape index: {}]
  %s6 = inlined_call_operand.vmem [shape: f32[1,256], index: 6, kind: input, shape index: {}]
  %s7 = inlined_call_operand.hbm [shape: bf16[128,256], index: 7, kind: input, shape index: {}]
  %s8 = inlined_call_operand.vmem [shape: f32[1,256], index: 8, kind: input, shape index: {}]
  %s9 = inlined_call_operand.<no memory space> [shape: f32[1], index: 9, kind: input, shape index: {}]
  %s10 = inlined_call_operand.hbm [shape: f32[2,16,256], index: 10, kind: output, shape index: {}]
  %s11 = sld [smem:[#allocation0]]
  $region85: #{tpu_custom_call.1} parent=0
    _
  %s13 = ssub.s32 1, %s11
  %s14 = scalar_select 0, %s13, %s11
  %15 = sst [smem:[#allocation3]] %s9
  $region1: #{tpu_custom_call.1} parent=0
    #allocation4 [shape = 'u8[196608]{0}', space=vmem, size = 0x30000, scoped, tag = 'input window, operand 1, single buffered']
    #allocation5 [shape = 's32[2]{0}', space=sflag, size = 0x8, scoped, tag = 'scoped memory for tpu_custom_call.1']
    #allocation6 [shape = 's32[2]{0}', space=sflag, size = 0x8, scoped, tag = 'scoped memory for tpu_custom_call.1']
    #allocation7 [shape = 'u8[393216]{0}', space=vmem, size = 0x60000, scoped, tag = 'input window, operand 4, single buffered']
    #allocation8 [shape = 's32[1]{0}', space=sflag, size = 0x4, scoped, tag = 'scoped memory for tpu_custom_call.1']
    #allocation9 [shape = 'u8[65536]{0}', space=vmem, size = 0x10000, scoped, tag = 'input window, operand 7, single buffered']
    #allocation10 [shape = 'u8[32768]{0}', space=vmem, size = 0x8000, scoped, tag = 'output window, operand 0']
    %16 = vsyncpa [#allocation5], 0
    %17 = vsyncpa [#allocation8], 0
    %18 = vsyncpa [#allocation6], 0
    %s19 = scalar_lea.sflag [#allocation6], 1
    %20 = vsyncpa %s19, 0
    loop: start=0, step=1, limit=4
    $region2: #{tpu_custom_call.1} parent=1 // loop_pre_header
      _
    $region3: #{tpu_custom_call.1} parent=1 // loop_header
      %s22 = sphi 0, %s26
      %p23 = scmp.ge.s32.totalorder %s22, 4
      %s32 = sphi 0, %s34
      %s35 = sphi 0, %s32
      %s36 = sphi 0, %s35
      %s52 = sphi 0, %s36
      %s56 = sphi 0, %s56
      %s58 = sphi 0, %s56
      %s59 = sphi 0, %s58
      %s73 = sphi 0, %s59
      %s77 = sphi 0, %s77
      %s79 = sphi 0, %s77
      %s80 = sphi 0, %s79
      %s94 = sphi 0, %s80
      %s98 = sphi 0, %s98
      %s100 = sphi 0, %s98
      %s101 = sphi 0, %s100
      %s115 = sphi 0, %s101
      %s119 = sphi 0, %s119
      %s121 = sphi 0, %s119
      %s122 = sphi 0, %s121
      %s136 = sphi 0, %s122
      %s140 = sphi 0, %s140
      %s142 = sphi 0, %s140
      %s143 = sphi 0, %s142
      %s157 = sphi 0, %s143
      %s161 = sphi 0, %s161
      %s163 = sphi 0, %s161
      %s164 = sphi 0, %s163
      %s178 = sphi 0, %s164
      %s182 = sphi 0, %s182
      %s184 = sphi 0, %s182
      %s185 = sphi 0, %s184
      %s199 = sphi 0, %s185
      %s203 = sphi 0, %s203
      %s205 = sphi 0, %s203
      %s206 = sphi 0, %s205
      %s220 = sphi 0, %s206
      %s224 = sphi 0, %s224
      %s226 = sphi 0, %s224
      %s227 = sphi 0, %s226
      %s241 = sphi 0, %s227
      %s247 = sphi 0, %s249
      %s250 = sphi 0, %s247
      %s251 = sphi 0, %s250
      %s267 = sphi 0, %s251
    $region4: #{tpu_custom_call.1} parent=1 // loop_header_branch
      %25 = sbr.rel (%p23) target = $region8
    $region5: #{tpu_custom_call.1} parent=1 // loop_body
      %s27 = ssub.s32 %s22, 1
      %s28 = ssub.s32 %s22, 2
      %s29 = sadd.s32 %s22, 1
      %s30 = ssub.s32 %s22, %s29
      %p31 = scmp.eq.s32.totalorder %s30, 0
      %s33 = sadd.s32 %s32, 1
      %s34 = scalar_select %p31, %s32, %s33
      %p37 = pneg %p31
      %p38 = scmp.eq.s32.totalorder %s22, 1
      %p39 = por %p37, %p38
      %p40 = scmp.ne.s32.totalorder %s32, %s35
      %p41 = scmp.eq.s32.totalorder %s22, 0
      %p42 = por %p40, %p41
      %p43 = scmp.ne.s32.totalorder %s32, %s35
      %p44 = scmp.eq.s32.totalorder %s27, 1
      %p45 = por %p43, %p44
      %p46 = scmp.ne.s32.totalorder %s35, %s36
      %p47 = scmp.eq.s32.totalorder %s27, 0
      %p48 = por %p46, %p47
      %p49 = scmp.ne.s32.totalorder %s35, %s36
      %p50 = scmp.eq.s32.totalorder %s28, 1
      %p51 = por %p49, %p50
      %p53 = scmp.ne.s32.totalorder %s36, %s52
      %p54 = scmp.eq.s32.totalorder %s28, 0
      %p55 = por %p53, %p54
      %s57 = sadd.s32 %s56, 1
      %p60 = scmp.eq.s32.totalorder %s22, 1
      %p61 = scmp.ne.s32.totalorder %s56, %s58
      %p62 = scmp.eq.s32.totalorder %s22, 0
      %p63 = por %p61, %p62
      %p64 = scmp.ne.s32.totalorder %s56, %s58
      %p65 = scmp.eq.s32.totalorder %s27, 1
      %p66 = por %p64, %p65
      %p67 = scmp.ne.s32.totalorder %s58, %s59
      %p68 = scmp.eq.s32.totalorder %s27, 0
      %p69 = por %p67, %p68
      %p70 = scmp.ne.s32.totalorder %s58, %s59
      %p71 = scmp.eq.s32.totalorder %s28, 1
      %p72 = por %p70, %p71
      %p74 = scmp.ne.s32.totalorder %s59, %s73
      %p75 = scmp.eq.s32.totalorder %s28, 0
      %p76 = por %p74, %p75
      %s78 = sadd.s32 %s77, 1
      %p81 = scmp.eq.s32.totalorder %s22, 1
      %p82 = scmp.ne.s32.totalorder %s77, %s79
      %p83 = scmp.eq.s32.totalorder %s22, 0
      %p84 = por %p82, %p83
      %p85 = scmp.ne.s32.totalorder %s77, %s79
      %p86 = scmp.eq.s32.totalorder %s27, 1
      %p87 = por %p85, %p86
      %p88 = scmp.ne.s32.totalorder %s79, %s80
      %p89 = scmp.eq.s32.totalorder %s27, 0
      %p90 = por %p88, %p89
      %p91 = scmp.ne.s32.totalorder %s79, %s80
      %p92 = scmp.eq.s32.totalorder %s28, 1
      %p93 = por %p91, %p92
      %p95 = scmp.ne.s32.totalorder %s80, %s94
      %p96 = scmp.eq.s32.totalorder %s28, 0
      %p97 = por %p95, %p96
      %s99 = sadd.s32 %s98, 1
      %p102 = scmp.eq.s32.totalorder %s22, 1
      %p103 = scmp.ne.s32.totalorder %s98, %s100
      %p104 = scmp.eq.s32.totalorder %s22, 0
      %p105 = por %p103, %p104
      %p106 = scmp.ne.s32.totalorder %s98, %s100
      %p107 = scmp.eq.s32.totalorder %s27, 1
      %p108 = por %p106, %p107
      %p109 = scmp.ne.s32.totalorder %s100, %s101
      %p110 = scmp.eq.s32.totalorder %s27, 0
      %p111 = por %p109, %p110
      %p112 = scmp.ne.s32.totalorder %s100, %s101
      %p113 = scmp.eq.s32.totalorder %s28, 1
      %p114 = por %p112, %p113
      %p116 = scmp.ne.s32.totalorder %s101, %s115
      %p117 = scmp.eq.s32.totalorder %s28, 0
      %p118 = por %p116, %p117
      %s120 = sadd.s32 %s119, 1
      %p123 = scmp.eq.s32.totalorder %s22, 1
      %p124 = scmp.ne.s32.totalorder %s119, %s121
      %p125 = scmp.eq.s32.totalorder %s22, 0
      %p126 = por %p124, %p125
      %p127 = scmp.ne.s32.totalorder %s119, %s121
      %p128 = scmp.eq.s32.totalorder %s27, 1
      %p129 = por %p127, %p128
      %p130 = scmp.ne.s32.totalorder %s121, %s122
      %p131 = scmp.eq.s32.totalorder %s27, 0
      %p132 = por %p130, %p131
      %p133 = scmp.ne.s32.totalorder %s121, %s122
      %p134 = scmp.eq.s32.totalorder %s28, 1
      %p135 = por %p133, %p134
      %p137 = scmp.ne.s32.totalorder %s122, %s136
      %p138 = scmp.eq.s32.totalorder %s28, 0
      %p139 = por %p137, %p138
      %s141 = sadd.s32 %s140, 1
      %p144 = scmp.eq.s32.totalorder %s22, 1
      %p145 = scmp.ne.s32.totalorder %s140, %s142
      %p146 = scmp.eq.s32.totalorder %s22, 0
      %p147 = por %p145, %p146
      %p148 = scmp.ne.s32.totalorder %s140, %s142
      %p149 = scmp.eq.s32.totalorder %s27, 1
      %p150 = por %p148, %p149
      %p151 = scmp.ne.s32.totalorder %s142, %s143
      %p152 = scmp.eq.s32.totalorder %s27, 0
      %p153 = por %p151, %p152
      %p154 = scmp.ne.s32.totalorder %s142, %s143
      %p155 = scmp.eq.s32.totalorder %s28, 1
      %p156 = por %p154, %p155
      %p158 = scmp.ne.s32.totalorder %s143, %s157
      %p159 = scmp.eq.s32.totalorder %s28, 0
      %p160 = por %p158, %p159
      %s162 = sadd.s32 %s161, 1
      %p165 = scmp.eq.s32.totalorder %s22, 1
      %p166 = scmp.ne.s32.totalorder %s161, %s163
      %p167 = scmp.eq.s32.totalorder %s22, 0
      %p168 = por %p166, %p167
      %p169 = scmp.ne.s32.totalorder %s161, %s163
      %p170 = scmp.eq.s32.totalorder %s27, 1
      %p171 = por %p169, %p170
      %p172 = scmp.ne.s32.totalorder %s163, %s164
      %p173 = scmp.eq.s32.totalorder %s27, 0
      %p174 = por %p172, %p173
      %p175 = scmp.ne.s32.totalorder %s163, %s164
      %p176 = scmp.eq.s32.totalorder %s28, 1
      %p177 = por %p175, %p176
      %p179 = scmp.ne.s32.totalorder %s164, %s178
      %p180 = scmp.eq.s32.totalorder %s28, 0
      %p181 = por %p179, %p180
      %s183 = sadd.s32 %s182, 1
      %p186 = scmp.eq.s32.totalorder %s22, 1
      %p187 = scmp.ne.s32.totalorder %s182, %s184
      %p188 = scmp.eq.s32.totalorder %s22, 0
      %p189 = por %p187, %p188
      %p190 = scmp.ne.s32.totalorder %s182, %s184
      %p191 = scmp.eq.s32.totalorder %s27, 1
      %p192 = por %p190, %p191
      %p193 = scmp.ne.s32.totalorder %s184, %s185
      %p194 = scmp.eq.s32.totalorder %s27, 0
      %p195 = por %p193, %p194
      %p196 = scmp.ne.s32.totalorder %s184, %s185
      %p197 = scmp.eq.s32.totalorder %s28, 1
      %p198 = por %p196, %p197
      %p200 = scmp.ne.s32.totalorder %s185, %s199
      %p201 = scmp.eq.s32.totalorder %s28, 0
      %p202 = por %p200, %p201
      %s204 = sadd.s32 %s203, 1
      %p207 = scmp.eq.s32.totalorder %s22, 1
      %p208 = scmp.ne.s32.totalorder %s203, %s205
      %p209 = scmp.eq.s32.totalorder %s22, 0
      %p210 = por %p208, %p209
      %p211 = scmp.ne.s32.totalorder %s203, %s205
      %p212 = scmp.eq.s32.totalorder %s27, 1
      %p213 = por %p211, %p212
      %p214 = scmp.ne.s32.totalorder %s205, %s206
      %p215 = scmp.eq.s32.totalorder %s27, 0
      %p216 = por %p214, %p215
      %p217 = scmp.ne.s32.totalorder %s205, %s206
      %p218 = scmp.eq.s32.totalorder %s28, 1
      %p219 = por %p217, %p218
      %p221 = scmp.ne.s32.totalorder %s206, %s220
      %p222 = scmp.eq.s32.totalorder %s28, 0
      %p223 = por %p221, %p222
      %s225 = sadd.s32 %s224, 1
      %p228 = scmp.eq.s32.totalorder %s22, 1
      %p229 = scmp.ne.s32.totalorder %s224, %s226
      %p230 = scmp.eq.s32.totalorder %s22, 0
      %p231 = por %p229, %p230
      %p232 = scmp.ne.s32.totalorder %s224, %s226
      %p233 = scmp.eq.s32.totalorder %s27, 1
      %p234 = por %p232, %p233
      %p235 = scmp.ne.s32.totalorder %s226, %s227
      %p236 = scmp.eq.s32.totalorder %s27, 0
      %p237 = por %p235, %p236
      %p238 = scmp.ne.s32.totalorder %s226, %s227
      %p239 = scmp.eq.s32.totalorder %s28, 1
      %p240 = por %p238, %p239
      %p242 = scmp.ne.s32.totalorder %s227, %s241
      %p243 = scmp.eq.s32.totalorder %s28, 0
      %p244 = por %p242, %p243
      %s245 = ssub.s32 %s22, %s29
      %p246 = scmp.eq.s32.totalorder %s245, 0
      %s248 = sadd.s32 %s247, 1
      %s249 = scalar_select %p246, %s247, %s248
      %p252 = pneg %p246
      %p253 = scmp.eq.s32.totalorder %s22, 1
      %p254 = por %p252, %p253
      %p255 = scmp.ne.s32.totalorder %s247, %s250
      %p256 = scmp.eq.s32.totalorder %s22, 0
      %p257 = por %p255, %p256
      %p258 = scmp.ne.s32.totalorder %s247, %s250
      %p259 = scmp.eq.s32.totalorder %s27, 1
      %p260 = por %p258, %p259
      %p261 = scmp.ne.s32.totalorder %s250, %s251
      %p262 = scmp.eq.s32.totalorder %s27, 0
      %p263 = por %p261, %p262
      %p264 = scmp.ne.s32.totalorder %s250, %s251
      %p265 = scmp.eq.s32.totalorder %s28, 1
      %p266 = por %p264, %p265
      %p268 = scmp.ne.s32.totalorder %s251, %s267
      %p269 = scmp.eq.s32.totalorder %s28, 0
      %p270 = por %p268, %p269
      %p271 = scmp.le.s32.totalorder 1, %s22
      %p272 = scmp.lt.s32.totalorder %s22, 3
      %p273 = pnand %p271, %p272
      %p274 = pneg %p273
      // Predicated region
      $region9: #{tpu_custom_call.1} parent=5 // pred_check
        _
      $region10: #{tpu_custom_call.1} parent=5 // pred_check_branch
        %276 = sbr.rel (%p273) target = $region12
      $region11: #{tpu_custom_call.1} parent=5 // pred_region
        %s277 = ssub.s32 %s22, 1
        // Predicated region
        $region13: #{tpu_custom_call.1} parent=11 // pred_check
          %p278 = pneg %p69
        $region14: #{tpu_custom_call.1} parent=11 // pred_check_branch
          %280 = sbr.rel (%p278) target = $region16
        $region15: #{tpu_custom_call.1} parent=11 // pred_region
          %s282 = ssub.s32 6144, 6144
          %283 = vsyncadd [#allocation5], %s282
          %s284 = sshll.u32 [#allocation4], 4
          %s285 = int_to_ptr.vmem [resolvable:$true] %s284
          %290 = dma.hbm_to_vmem [thread:$0]  %s1, 6144, %s285, [#allocation5], 128, 128, 8
        $region16: #{tpu_custom_call.1} parent=11 // pred_fallthru
          _
        // Predicated region
        $region17: #{tpu_custom_call.1} parent=11 // pred_check
          %p291 = pneg %p90
        $region18: #{tpu_custom_call.1} parent=11 // pred_check_branch
          %293 = sbr.rel (%p291) target = $region20
        $region19: #{tpu_custom_call.1} parent=11 // pred_region
          _
        $region20: #{tpu_custom_call.1} parent=11 // pred_fallthru
          _
        // Predicated region
        $region21: #{tpu_custom_call.1} parent=11 // pred_check
          %p294 = pneg %p111
        $region22: #{tpu_custom_call.1} parent=11 // pred_check_branch
          %296 = sbr.rel (%p294) target = $region24
        $region23: #{tpu_custom_call.1} parent=11 // pred_region
          _
        $region24: #{tpu_custom_call.1} parent=11 // pred_fallthru
          _
        // Predicated region
        $region25: #{tpu_custom_call.1} parent=11 // pred_check
          %p297 = pneg %p132
        $region26: #{tpu_custom_call.1} parent=11 // pred_check_branch
          %299 = sbr.rel (%p297) target = $region28
        $region27: #{tpu_custom_call.1} parent=11 // pred_region
          %s301 = ssub.s32 12288, 12288
          %302 = vsyncadd [#allocation8], %s301
          %s303 = sshll.u32 [#allocation7], 4
          %s304 = int_to_ptr.vmem [resolvable:$true] %s303
          %309 = dma.hbm_to_vmem [thread:$0]  %s4, 12288, %s304, [#allocation8], 128, 128, 8
        $region28: #{tpu_custom_call.1} parent=11 // pred_fallthru
          _
        // Predicated region
        $region29: #{tpu_custom_call.1} parent=11 // pred_check
          %p310 = pneg %p153
        $region30: #{tpu_custom_call.1} parent=11 // pred_check_branch
          %312 = sbr.rel (%p310) target = $region32
        $region31: #{tpu_custom_call.1} parent=11 // pred_region
          _
        $region32: #{tpu_custom_call.1} parent=11 // pred_fallthru
          _
        // Predicated region
        $region33: #{tpu_custom_call.1} parent=11 // pred_check
          %p313 = pneg %p174
        $region34: #{tpu_custom_call.1} parent=11 // pred_check_branch
          %315 = sbr.rel (%p313) target = $region36
        $region35: #{tpu_custom_call.1} parent=11 // pred_region
          _
        $region36: #{tpu_custom_call.1} parent=11 // pred_fallthru
          _
        // Predicated region
        $region37: #{tpu_custom_call.1} parent=11 // pred_check
          %p316 = pneg %p195
        $region38: #{tpu_custom_call.1} parent=11 // pred_check_branch
          %318 = sbr.rel (%p316) target = $region40
        $region39: #{tpu_custom_call.1} parent=11 // pred_region
          %s320 = ssub.s32 2048, 2048
          %321 = vsyncadd [#allocation8], %s320
          %s322 = sshll.u32 [#allocation9], 4
          %s323 = int_to_ptr.vmem [resolvable:$true] %s322
          %328 = dma.hbm_to_vmem [thread:$0]  %s7, 2048, %s323, [#allocation8], 128, 128, 8
        $region40: #{tpu_custom_call.1} parent=11 // pred_fallthru
          _
        // Predicated region
        $region41: #{tpu_custom_call.1} parent=11 // pred_check
          %p329 = pneg %p216
        $region42: #{tpu_custom_call.1} parent=11 // pred_check_branch
          %331 = sbr.rel (%p329) target = $region44
        $region43: #{tpu_custom_call.1} parent=11 // pred_region
          _
        $region44: #{tpu_custom_call.1} parent=11 // pred_fallthru
          _
        // Predicated region
        $region45: #{tpu_custom_call.1} parent=11 // pred_check
          %p332 = pneg %p237
        $region46: #{tpu_custom_call.1} parent=11 // pred_check_branch
          %334 = sbr.rel (%p332) target = $region48
        $region47: #{tpu_custom_call.1} parent=11 // pred_region
          _
        $region48: #{tpu_custom_call.1} parent=11 // pred_fallthru
          _
      $region12: #{tpu_custom_call.1} parent=5 // pred_fallthru
        _
      %p335 = scmp.lt.s32.totalorder %s22, 2
      // Predicated region
      $region49: #{tpu_custom_call.1} parent=5 // pred_check
        %p336 = pneg %p335
      $region50: #{tpu_custom_call.1} parent=5 // pred_check_branch
        %338 = sbr.rel (%p336) target = $region52
      $region51: #{tpu_custom_call.1} parent=5 // pred_region
        // Predicated region
        $region53: #{tpu_custom_call.1} parent=51 // pred_check
          %p339 = pneg %p42
        $region54: #{tpu_custom_call.1} parent=51 // pred_check_branch
          %341 = sbr.rel (%p339) target = $region56
        $region55: #{tpu_custom_call.1} parent=51 // pred_region
          %p342 = scmp.lt.s32.totalorder %s22, 1
          %s343 = scalar_select %p342, %s22, 1
          %s344 = smul.addr %s343, 3
          %s345 = smul.addr %s344, 4
          %s346 = scalar_lea.vmem %s0, %s345
        $region56: #{tpu_custom_call.1} parent=51 // pred_fallthru
          _
      $region52: #{tpu_custom_call.1} parent=5 // pred_fallthru
        _
      %p347 = scmp.le.s32.totalorder 1, %s22
      %p348 = scmp.lt.s32.totalorder %s22, 3
      %p349 = pnand %p347, %p348
      %p350 = pneg %p349
      // Predicated region
      $region57: #{tpu_custom_call.1} parent=5 // pred_check
        _
      $region58: #{tpu_custom_call.1} parent=5 // pred_check_branch
        %352 = sbr.rel (%p349) target = $region60
      $region59: #{tpu_custom_call.1} parent=5 // pred_region
        %s353 = ssub.s32 %s22, 1
        // Predicated region
        $region61: #{tpu_custom_call.1} parent=59 // pred_check
          %p354 = pneg %p69
        $region62: #{tpu_custom_call.1} parent=59 // pred_check_branch
          %356 = sbr.rel (%p354) target = $region64
        $region63: #{tpu_custom_call.1} parent=59 // pred_region
          %357 = dma.done [#allocation5], 6144
        $region64: #{tpu_custom_call.1} parent=59 // pred_fallthru
          _
        // Predicated region
        $region65: #{tpu_custom_call.1} parent=59 // pred_check
          %p358 = pneg %p132
        $region66: #{tpu_custom_call.1} parent=59 // pred_check_branch
          %360 = sbr.rel (%p358) target = $region68
        $region67: #{tpu_custom_call.1} parent=59 // pred_region
          %361 = dma.done [#allocation8], 12288
        $region68: #{tpu_custom_call.1} parent=59 // pred_fallthru
          _
        // Predicated region
        $region69: #{tpu_custom_call.1} parent=59 // pred_check
          %p362 = pneg %p195
        $region70: #{tpu_custom_call.1} parent=59 // pred_check_branch
          %364 = sbr.rel (%p362) target = $region72
        $region71: #{tpu_custom_call.1} parent=59 // pred_region
          %365 = dma.done [#allocation8], 2048
        $region72: #{tpu_custom_call.1} parent=59 // pred_fallthru
          _
        %p366 = scmp.lt.s32.totalorder %s27, 1
        %s367 = scalar_select %p366, %s27, 1
        %s368 = smul.addr %s367, 3
        %s369 = smul.addr %s368, 4
        %s370 = scalar_lea.vmem %s0, %s369
        %p371 = pneg %p48
        %p372 = pneg %p45
        %p373 = pneg %p69
        %p374 = pneg %p66
        %p375 = pneg %p90
        %p376 = pneg %p87
        %p377 = pneg %p111
        %p378 = pneg %p108
        %p379 = pneg %p132
        %p380 = pneg %p129
        %p381 = pneg %p153
        %p382 = pneg %p150
        %p383 = pneg %p174
        %p384 = pneg %p171
        %p385 = pneg %p195
        %p386 = pneg %p192
        %p387 = pneg %p216
        %p388 = pneg %p213
        %p389 = pneg %p237
        %p390 = pneg %p234
        %p391 = pneg %p263
        %p392 = pneg %p260
        %s393 = sand.u32 %s250, 1
        %s394 = scalar_lea.sflag [#allocation6], %s393
        %s395 = sand.u32 %s250, 1
        %s396 = smul.addr %s395, 32
        %s397 = scalar_lea.vmem [#allocation10], %s396
        %p398 = scmp.lt.s32.totalorder %s27, 1
        %s399 = scalar_select %p398, %s27, 1
        %s400 = smul.addr %s399, 3
        %s401 = smul.addr %s400, 4
        %s402 = scalar_lea.vmem %s0, %s401
        %v404 = vld [vmem:[%s402] sm:$0xf]
        %v405 = vld [vmem:[%s402 + $0x4] sm:$0xf]
        %v406 = vld [vmem:[%s402 + $0x8] sm:$0x1]
        %s407 = sld [smem:[#allocation3]]
        %v408 = vld [vmem:[#allocation4] sm:$0xff]
        %v409 = vld [vmem:[#allocation4 + $0x8] sm:$0xff]
        %v410 = vld [vmem:[#allocation4 + $0x10] sm:$0xff]
        %v411 = vld [vmem:[#allocation4 + $0x18] sm:$0xff]
        %v412 = vld [vmem:[#allocation4 + $0x20] sm:$0xff]
        %v413 = vld [vmem:[#allocation4 + $0x28] sm:$0xff]
        %v414 = vld [vmem:[#allocation4 + $0x30] sm:$0xff]
        %v415 = vld [vmem:[#allocation4 + $0x38] sm:$0xff]
        %v416 = vld [vmem:[#allocation4 + $0x40] sm:$0xff]
        %v417 = vld [vmem:[#allocation4 + $0x48] sm:$0xff]
        %v418 = vld [vmem:[#allocation4 + $0x50] sm:$0xff]
        %v419 = vld [vmem:[#allocation4 + $0x58] sm:$0xff]
        %v420 = vld [vmem:[#allocation4 + $0x60] sm:$0xff]
        %v421 = vld [vmem:[#allocation4 + $0x68] sm:$0xff]
        %v422 = vld [vmem:[#allocation4 + $0x70] sm:$0xff]
        %v423 = vld [vmem:[#allocation4 + $0x78] sm:$0xff]
        %s424 = scalar_lea.vmem [#allocation4], 128
        %v425 = vld [vmem:[%s424] sm:$0xff]
        %v426 = vld [vmem:[%s424 + $0x8] sm:$0xff]
        %v427 = vld [vmem:[%s424 + $0x10] sm:$0xff]
        %v428 = vld [vmem:[%s424 + $0x18] sm:$0xff]
        %v429 = vld [vmem:[%s424 + $0x20] sm:$0xff]
        %v430 = vld [vmem:[%s424 + $0x28] sm:$0xff]
        %v431 = vld [vmem:[%s424 + $0x30] sm:$0xff]
        %v432 = vld [vmem:[%s424 + $0x38] sm:$0xff]
        %v433 = vld [vmem:[%s424 + $0x40] sm:$0xff]
        %v434 = vld [vmem:[%s424 + $0x48] sm:$0xff]
        %v435 = vld [vmem:[%s424 + $0x50] sm:$0xff]
        %v436 = vld [vmem:[%s424 + $0x58] sm:$0xff]
        %v437 = vld [vmem:[%s424 + $0x60] sm:$0xff]
        %v438 = vld [vmem:[%s424 + $0x68] sm:$0xff]
        %v439 = vld [vmem:[%s424 + $0x70] sm:$0xff]
        %v440 = vld [vmem:[%s424 + $0x78] sm:$0xff]
        %v444 = vunpack.c.l.b16 %v404
        %v445 = vunpack.c.l.b16 %v405
        %v446 = vunpack.c.l.b16 %v406
        %v447 = vpack.c.b16 %v445, %v444
        %v448 = vpack.c.b16 %v446, %v446
        %vm449 = vsmask.f32 7424
        %v451 = vshrl.u32 %v447, 16
        %v453 = vshll.u32 %v447, 16
        %v455 = vrot.slane %v453, 1
        %v456 = vor.u32 %v451, %v455
        %v458 = vshll.u32 %v448, 16
        %v460 = vrot.slane %v458, 1
        %v461 = vsel %vm449, %v456, %v460
        %v479 = vunpack.c.l.b16 %v425
        %v480 = vunpack.c.h.b16 %v425
        %v481 = vunpack.c.l.b16 %v426
        %v482 = vunpack.c.h.b16 %v426
        %v483 = vunpack.c.l.b16 %v427
        %v484 = vunpack.c.h.b16 %v427
        %v485 = vunpack.c.l.b16 %v428
        %v486 = vunpack.c.h.b16 %v428
        %v487 = vunpack.c.l.b16 %v429
        %v488 = vunpack.c.h.b16 %v429
        %v489 = vunpack.c.l.b16 %v430
        %v490 = vunpack.c.h.b16 %v430
        %v491 = vunpack.c.l.b16 %v431
        %v492 = vunpack.c.h.b16 %v431
        %v493 = vunpack.c.l.b16 %v432
        %v494 = vunpack.c.h.b16 %v432
        %v495 = vunpack.c.l.b16 %v433
        %v496 = vunpack.c.h.b16 %v433
        %v497 = vunpack.c.l.b16 %v434
        %v498 = vunpack.c.h.b16 %v434
        %v499 = vunpack.c.l.b16 %v435
        %v500 = vunpack.c.h.b16 %v435
        %v501 = vunpack.c.l.b16 %v436
        %v502 = vunpack.c.h.b16 %v436
        %v503 = vunpack.c.l.b16 %v437
        %v504 = vunpack.c.h.b16 %v437
        %v505 = vunpack.c.l.b16 %v438
        %v506 = vunpack.c.h.b16 %v438
        %v507 = vunpack.c.l.b16 %v439
        %v508 = vunpack.c.h.b16 %v439
        %v509 = vunpack.c.l.b16 %v440
        %v510 = vunpack.c.h.b16 %v440
        %v511 = vpack.c.b16 %v481, %v479
        %v512 = vpack.c.b16 %v482, %v480
        %v513 = vpack.c.b16 %v485, %v483
        %v514 = vpack.c.b16 %v486, %v484
        %v515 = vpack.c.b16 %v489, %v487
        %v516 = vpack.c.b16 %v490, %v488
        %v517 = vpack.c.b16 %v493, %v491
        %v518 = vpack.c.b16 %v494, %v492
        %v519 = vpack.c.b16 %v497, %v495
        %v520 = vpack.c.b16 %v498, %v496
        %v521 = vpack.c.b16 %v501, %v499
        %v522 = vpack.c.b16 %v502, %v500
        %v523 = vpack.c.b16 %v505, %v503
        %v524 = vpack.c.b16 %v506, %v504
        %v525 = vpack.c.b16 %v509, %v507
        %v526 = vpack.c.b16 %v510, %v508
        %543 = vmatprep.subr.bf16.mxu0 %v512
        %544 = vmatpush1.bf16.msra.mxu0 %v511
        %545 = vmatprep.subr.bf16.mxu0 %v514
        %546 = vmatpush1.bf16.msra.mxu0 %v513
        %547 = vmatprep.subr.bf16.mxu0 %v516
        %548 = vmatpush1.bf16.msra.mxu0 %v515
        %549 = vmatprep.subr.bf16.mxu0 %v518
        %550 = vmatpush1.bf16.msra.mxu0 %v517
        %551 = vmatprep.subr.bf16.mxu0 %v520
        %552 = vmatpush1.bf16.msra.mxu0 %v519
        %553 = vmatprep.subr.bf16.mxu0 %v522
        %554 = vmatpush1.bf16.msra.mxu0 %v521
        %555 = vmatprep.subr.bf16.mxu0 %v524
        %556 = vmatpush1.bf16.msra.mxu0 %v523
        %557 = vmatprep.subr.bf16.mxu0 %v526
        %558 = vmatpush1.bf16.msra.mxu0 %v525
        %559 = vmatprep.subr.bf16.mxu0 0
        %560 = vmatpush1.bf16.msra.mxu0 0
        %561 = vmatprep.subr.bf16.mxu0 0
        %562 = vmatpush1.bf16.msra.mxu0 0
        %563 = vmatprep.subr.bf16.mxu0 0
        %564 = vmatpush1.bf16.msra.mxu0 0
        %565 = vmatprep.subr.bf16.mxu0 0
        %566 = vmatpush1.bf16.msra.mxu0 0
        %567 = vmatprep.subr.bf16.mxu0 0
        %568 = vmatpush1.bf16.msra.mxu0 0
        %569 = vmatprep.subr.bf16.mxu0 0
        %570 = vmatpush1.bf16.msra.mxu0 0
        %571 = vmatprep.subr.bf16.mxu0 0
        %572 = vmatpush1.bf16.msra.mxu0 0
        %573 = vmatprep.subr.bf16.mxu0 0
        %574 = vmatpush1.bf16.msra.mxu0 0
        %575 = vmatprep.mubr.bf16.mxu0 0
        %576 = vmatmul.mubr.bf16.gmra.mrb[0].mxu0 %v461
        %v577 = vpop.f32.mrb[0].mxu0
        %v578 = vadd.f32 0.0, %v577
        %v579 = vpop.f32.mrb[0].mxu0
        %v580 = vadd.f32 0.0, %v579
        %v581 = vpop.f32.mrb[0].mxu0
        %v582 = vadd.f32 0.0, %v581
        %v583 = vpop.f32.mrb[0].mxu0
        %v584 = vadd.f32 0.0, %v583
        %585 = vdwg.mxu0
        %v603 = vunpack.c.l.b16 %v408
        %v604 = vunpack.c.h.b16 %v408
        %v605 = vunpack.c.l.b16 %v409
        %v606 = vunpack.c.h.b16 %v409
        %v607 = vunpack.c.l.b16 %v410
        %v608 = vunpack.c.h.b16 %v410
        %v609 = vunpack.c.l.b16 %v411
        %v610 = vunpack.c.h.b16 %v411
        %v611 = vunpack.c.l.b16 %v412
        %v612 = vunpack.c.h.b16 %v412
        %v613 = vunpack.c.l.b16 %v413
        %v614 = vunpack.c.h.b16 %v413
        %v615 = vunpack.c.l.b16 %v414
        %v616 = vunpack.c.h.b16 %v414
        %v617 = vunpack.c.l.b16 %v415
        %v618 = vunpack.c.h.b16 %v415
        %v619 = vunpack.c.l.b16 %v416
        %v620 = vunpack.c.h.b16 %v416
        %v621 = vunpack.c.l.b16 %v417
        %v622 = vunpack.c.h.b16 %v417
        %v623 = vunpack.c.l.b16 %v418
        %v624 = vunpack.c.h.b16 %v418
        %v625 = vunpack.c.l.b16 %v419
        %v626 = vunpack.c.h.b16 %v419
        %v627 = vunpack.c.l.b16 %v420
        %v628 = vunpack.c.h.b16 %v420
        %v629 = vunpack.c.l.b16 %v421
        %v630 = vunpack.c.h.b16 %v421
        %v631 = vunpack.c.l.b16 %v422
        %v632 = vunpack.c.h.b16 %v422
        %v633 = vunpack.c.l.b16 %v423
        %v634 = vunpack.c.h.b16 %v423
        %v635 = vpack.c.b16 %v605, %v603
        %v636 = vpack.c.b16 %v606, %v604
        %v637 = vpack.c.b16 %v609, %v607
        %v638 = vpack.c.b16 %v610, %v608
        %v639 = vpack.c.b16 %v613, %v611
        %v640 = vpack.c.b16 %v614, %v612
        %v641 = vpack.c.b16 %v617, %v615
        %v642 = vpack.c.b16 %v618, %v616
        %v643 = vpack.c.b16 %v621, %v619
        %v644 = vpack.c.b16 %v622, %v620
        %v645 = vpack.c.b16 %v625, %v623
        %v646 = vpack.c.b16 %v626, %v624
        %v647 = vpack.c.b16 %v629, %v627
        %v648 = vpack.c.b16 %v630, %v628
        %v649 = vpack.c.b16 %v633, %v631
        %v650 = vpack.c.b16 %v634, %v632
        %667 = vmatprep.subr.bf16.mxu0 %v636
        %668 = vmatpush1.bf16.msra.mxu0 %v635
        %669 = vmatprep.subr.bf16.mxu0 %v638
        %670 = vmatpush1.bf16.msra.mxu0 %v637
        %671 = vmatprep.subr.bf16.mxu0 %v640
        %672 = vmatpush1.bf16.msra.mxu0 %v639
        %673 = vmatprep.subr.bf16.mxu0 %v642
        %674 = vmatpush1.bf16.msra.mxu0 %v641
        %675 = vmatprep.subr.bf16.mxu0 %v644
        %676 = vmatpush1.bf16.msra.mxu0 %v643
        %677 = vmatprep.subr.bf16.mxu0 %v646
        %678 = vmatpush1.bf16.msra.mxu0 %v645
        %679 = vmatprep.subr.bf16.mxu0 %v648
        %680 = vmatpush1.bf16.msra.mxu0 %v647
        %681 = vmatprep.subr.bf16.mxu0 %v650
        %682 = vmatpush1.bf16.msra.mxu0 %v649
        %683 = vmatprep.subr.bf16.mxu0 0
        %684 = vmatpush1.bf16.msra.mxu0 0
        %685 = vmatprep.subr.bf16.mxu0 0
        %686 = vmatpush1.bf16.msra.mxu0 0
        %687 = vmatprep.subr.bf16.mxu0 0
        %688 = vmatpush1.bf16.msra.mxu0 0
        %689 = vmatprep.subr.bf16.mxu0 0
        %690 = vmatpush1.bf16.msra.mxu0 0
        %691 = vmatprep.subr.bf16.mxu0 0
        %692 = vmatpush1.bf16.msra.mxu0 0
        %693 = vmatprep.subr.bf16.mxu0 0
        %694 = vmatpush1.bf16.msra.mxu0 0
        %695 = vmatprep.subr.bf16.mxu0 0
        %696 = vmatpush1.bf16.msra.mxu0 0
        %697 = vmatprep.subr.bf16.mxu0 0
        %698 = vmatpush1.bf16.msra.mxu0 0
        %699 = vmatprep.mubr.bf16.mxu0 0
        %700 = vmatmul.mubr.bf16.gmra.mrb[0].mxu0 %v447
        %v701 = vpop.f32.mrb[0].mxu0
        %v702 = vadd.f32 %v578, %v701
        %v703 = vpop.f32.mrb[0].mxu0
        %v704 = vadd.f32 %v580, %v703
        %v705 = vpop.f32.mrb[0].mxu0
        %v706 = vadd.f32 %v582, %v705
        %v707 = vpop.f32.mrb[0].mxu0
        %v708 = vadd.f32 %v584, %v707
        %709 = vdwg.mxu0
        %s710 = scalar_lea.vmem [#allocation4], 256
        %v711 = vld [vmem:[%s710] sm:$0xff]
        %v712 = vld [vmem:[%s710 + $0x8] sm:$0xff]
        %v713 = vld [vmem:[%s710 + $0x10] sm:$0xff]
        %v714 = vld [vmem:[%s710 + $0x18] sm:$0xff]
        %v715 = vld [vmem:[%s710 + $0x20] sm:$0xff]
        %v716 = vld [vmem:[%s710 + $0x28] sm:$0xff]
        %v717 = vld [vmem:[%s710 + $0x30] sm:$0xff]
        %v718 = vld [vmem:[%s710 + $0x38] sm:$0xff]
        %v719 = vld [vmem:[%s710 + $0x40] sm:$0xff]
        %v720 = vld [vmem:[%s710 + $0x48] sm:$0xff]
        %v721 = vld [vmem:[%s710 + $0x50] sm:$0xff]
        %v722 = vld [vmem:[%s710 + $0x58] sm:$0xff]
        %v723 = vld [vmem:[%s710 + $0x60] sm:$0xff]
        %v724 = vld [vmem:[%s710 + $0x68] sm:$0xff]
        %v725 = vld [vmem:[%s710 + $0x70] sm:$0xff]
        %v726 = vld [vmem:[%s710 + $0x78] sm:$0xff]
        %vm727 = vcmask 1046528
        %v728 = vrot.slane %v447, 1
        %v729 = vrot.slane %v448, 1
        %v730 = vsel %vm727, %v728, %v729
        %v748 = vunpack.c.l.b16 %v711
        %v749 = vunpack.c.h.b16 %v711
        %v750 = vunpack.c.l.b16 %v712
        %v751 = vunpack.c.h.b16 %v712
        %v752 = vunpack.c.l.b16 %v713
        %v753 = vunpack.c.h.b16 %v713
        %v754 = vunpack.c.l.b16 %v714
        %v755 = vunpack.c.h.b16 %v714
        %v756 = vunpack.c.l.b16 %v715
        %v757 = vunpack.c.h.b16 %v715
        %v758 = vunpack.c.l.b16 %v716
        %v759 = vunpack.c.h.b16 %v716
        %v760 = vunpack.c.l.b16 %v717
        %v761 = vunpack.c.h.b16 %v717
        %v762 = vunpack.c.l.b16 %v718
        %v763 = vunpack.c.h.b16 %v718
        %v764 = vunpack.c.l.b16 %v719
        %v765 = vunpack.c.h.b16 %v719
        %v766 = vunpack.c.l.b16 %v720
        %v767 = vunpack.c.h.b16 %v720
        %v768 = vunpack.c.l.b16 %v721
        %v769 = vunpack.c.h.b16 %v721
        %v770 = vunpack.c.l.b16 %v722
        %v771 = vunpack.c.h.b16 %v722
        %v772 = vunpack.c.l.b16 %v723
        %v773 = vunpack.c.h.b16 %v723
        %v774 = vunpack.c.l.b16 %v724
        %v775 = vunpack.c.h.b16 %v724
        %v776 = vunpack.c.l.b16 %v725
        %v777 = vunpack.c.h.b16 %v725
        %v778 = vunpack.c.l.b16 %v726
        %v779 = vunpack.c.h.b16 %v726
        %v780 = vpack.c.b16 %v750, %v748
        %v781 = vpack.c.b16 %v751, %v749
        %v782 = vpack.c.b16 %v754, %v752
        %v783 = vpack.c.b16 %v755, %v753
        %v784 = vpack.c.b16 %v758, %v756
        %v785 = vpack.c.b16 %v759, %v757
        %v786 = vpack.c.b16 %v762, %v760
        %v787 = vpack.c.b16 %v763, %v761
        %v788 = vpack.c.b16 %v766, %v764
        %v789 = vpack.c.b16 %v767, %v765
        %v790 = vpack.c.b16 %v770, %v768
        %v791 = vpack.c.b16 %v771, %v769
        %v792 = vpack.c.b16 %v774, %v772
        %v793 = vpack.c.b16 %v775, %v773
        %v794 = vpack.c.b16 %v778, %v776
        %v795 = vpack.c.b16 %v779, %v777
        %812 = vmatprep.subr.bf16.mxu0 %v781
        %813 = vmatpush1.bf16.msra.mxu0 %v780
        %814 = vmatprep.subr.bf16.mxu0 %v783
        %815 = vmatpush1.bf16.msra.mxu0 %v782
        %816 = vmatprep.subr.bf16.mxu0 %v785
        %817 = vmatpush1.bf16.msra.mxu0 %v784
        %818 = vmatprep.subr.bf16.mxu0 %v787
        %819 = vmatpush1.bf16.msra.mxu0 %v786
        %820 = vmatprep.subr.bf16.mxu0 %v789
        %821 = vmatpush1.bf16.msra.mxu0 %v788
        %822 = vmatprep.subr.bf16.mxu0 %v791
        %823 = vmatpush1.bf16.msra.mxu0 %v790
        %824 = vmatprep.subr.bf16.mxu0 %v793
        %825 = vmatpush1.bf16.msra.mxu0 %v792
        %826 = vmatprep.subr.bf16.mxu0 %v795
        %827 = vmatpush1.bf16.msra.mxu0 %v794
        %828 = vmatprep.subr.bf16.mxu0 0
        %829 = vmatpush1.bf16.msra.mxu0 0
        %830 = vmatprep.subr.bf16.mxu0 0
        %831 = vmatpush1.bf16.msra.mxu0 0
        %832 = vmatprep.subr.bf16.mxu0 0
        %833 = vmatpush1.bf16.msra.mxu0 0
        %834 = vmatprep.subr.bf16.mxu0 0
        %835 = vmatpush1.bf16.msra.mxu0 0
        %836 = vmatprep.subr.bf16.mxu0 0
        %837 = vmatpush1.bf16.msra.mxu0 0
        %838 = vmatprep.subr.bf16.mxu0 0
        %839 = vmatpush1.bf16.msra.mxu0 0
        %840 = vmatprep.subr.bf16.mxu0 0
        %841 = vmatpush1.bf16.msra.mxu0 0
        %842 = vmatprep.subr.bf16.mxu0 0
        %843 = vmatpush1.bf16.msra.mxu0 0
        %844 = vmatprep.mubr.bf16.mxu0 0
        %845 = vmatmul.mubr.bf16.gmra.mrb[0].mxu0 %v730
        %v846 = vpop.f32.mrb[0].mxu0
        %v847 = vadd.f32 0.0, %v846
        %v848 = vpop.f32.mrb[0].mxu0
        %v849 = vadd.f32 0.0, %v848
        %v850 = vpop.f32.mrb[0].mxu0
        %v851 = vadd.f32 0.0, %v850
        %v852 = vpop.f32.mrb[0].mxu0
        %v853 = vadd.f32 0.0, %v852
        %854 = vdwg.mxu0
        %v855 = vadd.f32 %v702, %v847
        %v856 = vadd.f32 %v704, %v849
        %v857 = vadd.f32 %v706, %v851
        %v858 = vadd.f32 %v708, %v853
        %v859 = vld [vmem:[%s2] sm:$0x3]
        %v861 = vlaneseq
        %v862 = vshrl.u32 %v861, 7
        %v863 = vsub.s32 0, %v862
        %v864 = vrot.slane %v859, %v863
        %v865 = vlaneseq
        %v866 = vshrl.u32 %v865, 7
        %v867 = vsub.s32 1, %v866
        %v868 = vrot.slane %v859, %v867
        %v871 = vmul.f32 %v855, %v864
        %v872 = vmul.f32 %v856, %v868
        %v873 = vmul.f32 %v857, %v864
        %v874 = vmul.f32 %v858, %v868
        %v875 = vld [vmem:[%s3] sm:$0x3]
        %v877 = vlaneseq
        %v878 = vshrl.u32 %v877, 7
        %v879 = vsub.s32 0, %v878
        %v880 = vrot.slane %v875, %v879
        %v881 = vlaneseq
        %v882 = vshrl.u32 %v881, 7
        %v883 = vsub.s32 1, %v882
        %v884 = vrot.slane %v875, %v883
        %v887 = vadd.f32 %v871, %v880
        %v888 = vadd.f32 %v872, %v884
        %v889 = vadd.f32 %v873, %v880
        %v890 = vadd.f32 %v874, %v884
        %vm891 = vcmp.ge.f32.partialorder %v887, 0.0
        %vm892 = vcmp.ge.f32.partialorder %v888, 0.0
        %vm893 = vcmp.ge.f32.partialorder %v889, 0.0
        %vm894 = vcmp.ge.f32.partialorder %v890, 0.0
        %v895 = vstv %s407
        %v896 = vmul.f32 %v895, %v887
        %v897 = vmul.f32 %v895, %v888
        %v898 = vmul.f32 %v895, %v889
        %v899 = vmul.f32 %v895, %v890
        %v900 = vsel %vm891, %v887, %v896
        %v901 = vsel %vm892, %v888, %v897
        %v902 = vsel %vm893, %v889, %v898
        %v903 = vsel %vm894, %v890, %v899
        %v904 = vpack.c.bf16 %v902, %v900
        %v905 = vpack.c.bf16 %v903, %v901
        %s906 = scalar_lea.vmem [#allocation7], 256
        %v907 = vld [vmem:[%s906] sm:$0xff]
        %v908 = vld [vmem:[%s906 + $0x8] sm:$0xff]
        %v909 = vld [vmem:[%s906 + $0x10] sm:$0xff]
        %v910 = vld [vmem:[%s906 + $0x18] sm:$0xff]
        %v911 = vld [vmem:[%s906 + $0x20] sm:$0xff]
        %v912 = vld [vmem:[%s906 + $0x28] sm:$0xff]
        %v913 = vld [vmem:[%s906 + $0x30] sm:$0xff]
        %v914 = vld [vmem:[%s906 + $0x38] sm:$0xff]
        %v915 = vld [vmem:[%s906 + $0x40] sm:$0xff]
        %v916 = vld [vmem:[%s906 + $0x48] sm:$0xff]
        %v917 = vld [vmem:[%s906 + $0x50] sm:$0xff]
        %v918 = vld [vmem:[%s906 + $0x58] sm:$0xff]
        %v919 = vld [vmem:[%s906 + $0x60] sm:$0xff]
        %v920 = vld [vmem:[%s906 + $0x68] sm:$0xff]
        %v921 = vld [vmem:[%s906 + $0x70] sm:$0xff]
        %v922 = vld [vmem:[%s906 + $0x78] sm:$0xff]
        %v923 = vld [vmem:[%s906 + $0x80] sm:$0xff]
        %v924 = vld [vmem:[%s906 + $0x88] sm:$0xff]
        %v925 = vld [vmem:[%s906 + $0x90] sm:$0xff]
        %v926 = vld [vmem:[%s906 + $0x98] sm:$0xff]
        %v927 = vld [vmem:[%s906 + $0xa0] sm:$0xff]
        %v928 = vld [vmem:[%s906 + $0xa8] sm:$0xff]
        %v929 = vld [vmem:[%s906 + $0xb0] sm:$0xff]
        %v930 = vld [vmem:[%s906 + $0xb8] sm:$0xff]
        %v931 = vld [vmem:[%s906 + $0xc0] sm:$0xff]
        %v932 = vld [vmem:[%s906 + $0xc8] sm:$0xff]
        %v933 = vld [vmem:[%s906 + $0xd0] sm:$0xff]
        %v934 = vld [vmem:[%s906 + $0xd8] sm:$0xff]
        %v935 = vld [vmem:[%s906 + $0xe0] sm:$0xff]
        %v936 = vld [vmem:[%s906 + $0xe8] sm:$0xff]
        %v937 = vld [vmem:[%s906 + $0xf0] sm:$0xff]
        %v938 = vld [vmem:[%s906 + $0xf8] sm:$0xff]
        %v971 = vunpack.c.l.b16 %v907
        %v972 = vunpack.c.h.b16 %v907
        %v973 = vunpack.c.l.b16 %v908
        %v974 = vunpack.c.h.b16 %v908
        %v975 = vunpack.c.l.b16 %v909
        %v976 = vunpack.c.h.b16 %v909
        %v977 = vunpack.c.l.b16 %v910
        %v978 = vunpack.c.h.b16 %v910
        %v979 = vunpack.c.l.b16 %v911
        %v980 = vunpack.c.h.b16 %v911
        %v981 = vunpack.c.l.b16 %v912
        %v982 = vunpack.c.h.b16 %v912
        %v983 = vunpack.c.l.b16 %v913
        %v984 = vunpack.c.h.b16 %v913
        %v985 = vunpack.c.l.b16 %v914
        %v986 = vunpack.c.h.b16 %v914
        %v987 = vunpack.c.l.b16 %v915
        %v988 = vunpack.c.h.b16 %v915
        %v989 = vunpack.c.l.b16 %v916
        %v990 = vunpack.c.h.b16 %v916
        %v991 = vunpack.c.l.b16 %v917
        %v992 = vunpack.c.h.b16 %v917
        %v993 = vunpack.c.l.b16 %v918
        %v994 = vunpack.c.h.b16 %v918
        %v995 = vunpack.c.l.b16 %v919
        %v996 = vunpack.c.h.b16 %v919
        %v997 = vunpack.c.l.b16 %v920
        %v998 = vunpack.c.h.b16 %v920
        %v999 = vunpack.c.l.b16 %v921
        %v1000 = vunpack.c.h.b16 %v921
        %v1001 = vunpack.c.l.b16 %v922
        %v1002 = vunpack.c.h.b16 %v922
        %v1003 = vunpack.c.l.b16 %v923
        %v1004 = vunpack.c.h.b16 %v923
        %v1005 = vunpack.c.l.b16 %v924
        %v1006 = vunpack.c.h.b16 %v924
        %v1007 = vunpack.c.l.b16 %v925
        %v1008 = vunpack.c.h.b16 %v925
        %v1009 = vunpack.c.l.b16 %v926
        %v1010 = vunpack.c.h.b16 %v926
        %v1011 = vunpack.c.l.b16 %v927
        %v1012 = vunpack.c.h.b16 %v927
        %v1013 = vunpack.c.l.b16 %v928
        %v1014 = vunpack.c.h.b16 %v928
        %v1015 = vunpack.c.l.b16 %v929
        %v1016 = vunpack.c.h.b16 %v929
        %v1017 = vunpack.c.l.b16 %v930
        %v1018 = vunpack.c.h.b16 %v930
        %v1019 = vunpack.c.l.b16 %v931
        %v1020 = vunpack.c.h.b16 %v931
        %v1021 = vunpack.c.l.b16 %v932
        %v1022 = vunpack.c.h.b16 %v932
        %v1023 = vunpack.c.l.b16 %v933
        %v1024 = vunpack.c.h.b16 %v933
        %v1025 = vunpack.c.l.b16 %v934
        %v1026 = vunpack.c.h.b16 %v934
        %v1027 = vunpack.c.l.b16 %v935
        %v1028 = vunpack.c.h.b16 %v935
        %v1029 = vunpack.c.l.b16 %v936
        %v1030 = vunpack.c.h.b16 %v936
        %v1031 = vunpack.c.l.b16 %v937
        %v1032 = vunpack.c.h.b16 %v937
        %v1033 = vunpack.c.l.b16 %v938
        %v1034 = vunpack.c.h.b16 %v938
        %v1035 = vpack.c.b16 %v973, %v971
        %v1036 = vpack.c.b16 %v974, %v972
        %v1037 = vpack.c.b16 %v977, %v975
        %v1038 = vpack.c.b16 %v978, %v976
        %v1039 = vpack.c.b16 %v981, %v979
        %v1040 = vpack.c.b16 %v982, %v980
        %v1041 = vpack.c.b16 %v985, %v983
        %v1042 = vpack.c.b16 %v986, %v984
        %v1043 = vpack.c.b16 %v989, %v987
        %v1044 = vpack.c.b16 %v990, %v988
        %v1045 = vpack.c.b16 %v993, %v991
        %v1046 = vpack.c.b16 %v994, %v992
        %v1047 = vpack.c.b16 %v997, %v995
        %v1048 = vpack.c.b16 %v998, %v996
        %v1049 = vpack.c.b16 %v1001, %v999
        %v1050 = vpack.c.b16 %v1002, %v1000
        %v1051 = vpack.c.b16 %v1005, %v1003
        %v1052 = vpack.c.b16 %v1006, %v1004
        %v1053 = vpack.c.b16 %v1009, %v1007
        %v1054 = vpack.c.b16 %v1010, %v1008
        %v1055 = vpack.c.b16 %v1013, %v1011
        %v1056 = vpack.c.b16 %v1014, %v1012
        %v1057 = vpack.c.b16 %v1017, %v1015
        %v1058 = vpack.c.b16 %v1018, %v1016
        %v1059 = vpack.c.b16 %v1021, %v1019
        %v1060 = vpack.c.b16 %v1022, %v1020
        %v1061 = vpack.c.b16 %v1025, %v1023
        %v1062 = vpack.c.b16 %v1026, %v1024
        %v1063 = vpack.c.b16 %v1029, %v1027
        %v1064 = vpack.c.b16 %v1030, %v1028
        %v1065 = vpack.c.b16 %v1033, %v1031
        %v1066 = vpack.c.b16 %v1034, %v1032
        %1099 = vmatprep.subr.bf16.mxu0 %v1036
        %1100 = vmatpush1.bf16.msra.mxu0 %v1035
        %1101 = vmatprep.subr.bf16.mxu0 %v1038
        %1102 = vmatpush1.bf16.msra.mxu0 %v1037
        %1103 = vmatprep.subr.bf16.mxu0 %v1040
        %1104 = vmatpush1.bf16.msra.mxu0 %v1039
        %1105 = vmatprep.subr.bf16.mxu0 %v1042
        %1106 = vmatpush1.bf16.msra.mxu0 %v1041
        %1107 = vmatprep.subr.bf16.mxu0 %v1044
        %1108 = vmatpush1.bf16.msra.mxu0 %v1043
        %1109 = vmatprep.subr.bf16.mxu0 %v1046
        %1110 = vmatpush1.bf16.msra.mxu0 %v1045
        %1111 = vmatprep.subr.bf16.mxu0 %v1048
        %1112 = vmatpush1.bf16.msra.mxu0 %v1047
        %1113 = vmatprep.subr.bf16.mxu0 %v1050
        %1114 = vmatpush1.bf16.msra.mxu0 %v1049
        %1115 = vmatprep.subr.bf16.mxu0 %v1052
        %1116 = vmatpush1.bf16.msra.mxu0 %v1051
        %1117 = vmatprep.subr.bf16.mxu0 %v1054
        %1118 = vmatpush1.bf16.msra.mxu0 %v1053
        %1119 = vmatprep.subr.bf16.mxu0 %v1056
        %1120 = vmatpush1.bf16.msra.mxu0 %v1055
        %1121 = vmatprep.subr.bf16.mxu0 %v1058
        %1122 = vmatpush1.bf16.msra.mxu0 %v1057
        %1123 = vmatprep.subr.bf16.mxu0 %v1060
        %1124 = vmatpush1.bf16.msra.mxu0 %v1059
        %1125 = vmatprep.subr.bf16.mxu0 %v1062
        %1126 = vmatpush1.bf16.msra.mxu0 %v1061
        %1127 = vmatprep.subr.bf16.mxu0 %v1064
        %1128 = vmatpush1.bf16.msra.mxu0 %v1063
        %1129 = vmatprep.subr.bf16.mxu0 %v1066
        %1130 = vmatpush1.bf16.msra.mxu0 %v1065
        %1131 = vmatprep.mubr.bf16.mxu0 %v905
        %1132 = vmatmul.mubr.bf16.gmra.mrb[0].mxu0 %v904
        %v1133 = vpop.f32.mrb[0].mxu0
        %v1134 = vadd.f32 0.0, %v1133
        %v1135 = vpop.f32.mrb[0].mxu0
        %v1136 = vadd.f32 0.0, %v1135
        %v1137 = vpop.f32.mrb[0].mxu0
        %v1138 = vadd.f32 0.0, %v1137
        %v1139 = vpop.f32.mrb[0].mxu0
        %v1140 = vadd.f32 0.0, %v1139
        %1141 = vdwg.mxu0
        %1142 = vst [vmem:[#allocation2] sm:$0xff] %v1134
        %1143 = vst [vmem:[#allocation2 + $0x8] sm:$0xff] %v1136
        %1144 = vst [vmem:[#allocation2 + $0x10] sm:$0xff] %v1138
        %1145 = vst [vmem:[#allocation2 + $0x18] sm:$0xff] %v1140
        %v1146 = vld [vmem:[#allocation2] sm:$0xfe]
        %v1147 = vld [vmem:[#allocation2 + $0x8] sm:$0xfe]
        %v1148 = vld [vmem:[#allocation2 + $0x10] sm:$0xff]
        %v1149 = vld [vmem:[#allocation2 + $0x18] sm:$0xff]
        %v1150 = vld [vmem:[#allocation7] sm:$0xff]
        %v1151 = vld [vmem:[#allocation7 + $0x8] sm:$0xff]
        %v1152 = vld [vmem:[#allocation7 + $0x10] sm:$0xff]
        %v1153 = vld [vmem:[#allocation7 + $0x18] sm:$0xff]
        %v1154 = vld [vmem:[#allocation7 + $0x20] sm:$0xff]
        %v1155 = vld [vmem:[#allocation7 + $0x28] sm:$0xff]
        %v1156 = vld [vmem:[#allocation7 + $0x30] sm:$0xff]
        %v1157 = vld [vmem:[#allocation7 + $0x38] sm:$0xff]
        %v1158 = vld [vmem:[#allocation7 + $0x40] sm:$0xff]
        %v1159 = vld [vmem:[#allocation7 + $0x48] sm:$0xff]
        %v1160 = vld [vmem:[#allocation7 + $0x50] sm:$0xff]
        %v1161 = vld [vmem:[#allocation7 + $0x58] sm:$0xff]
        %v1162 = vld [vmem:[#allocation7 + $0x60] sm:$0xff]
        %v1163 = vld [vmem:[#allocation7 + $0x68] sm:$0xff]
        %v1164 = vld [vmem:[#allocation7 + $0x70] sm:$0xff]
        %v1165 = vld [vmem:[#allocation7 + $0x78] sm:$0xff]
        %v1166 = vld [vmem:[#allocation7 + $0x80] sm:$0xff]
        %v1167 = vld [vmem:[#allocation7 + $0x88] sm:$0xff]
        %v1168 = vld [vmem:[#allocation7 + $0x90] sm:$0xff]
        %v1169 = vld [vmem:[#allocation7 + $0x98] sm:$0xff]
        %v1170 = vld [vmem:[#allocation7 + $0xa0] sm:$0xff]
        %v1171 = vld [vmem:[#allocation7 + $0xa8] sm:$0xff]
        %v1172 = vld [vmem:[#allocation7 + $0xb0] sm:$0xff]
        %v1173 = vld [vmem:[#allocation7 + $0xb8] sm:$0xff]
        %v1174 = vld [vmem:[#allocation7 + $0xc0] sm:$0xff]
        %v1175 = vld [vmem:[#allocation7 + $0xc8] sm:$0xff]
        %v1176 = vld [vmem:[#allocation7 + $0xd0] sm:$0xff]
        %v1177 = vld [vmem:[#allocation7 + $0xd8] sm:$0xff]
        %v1178 = vld [vmem:[#allocation7 + $0xe0] sm:$0xff]
        %v1179 = vld [vmem:[#allocation7 + $0xe8] sm:$0xff]
        %v1180 = vld [vmem:[#allocation7 + $0xf0] sm:$0xff]
        %v1181 = vld [vmem:[#allocation7 + $0xf8] sm:$0xff]
        %v1214 = vunpack.c.l.b16 %v1150
        %v1215 = vunpack.c.h.b16 %v1150
        %v1216 = vunpack.c.l.b16 %v1151
        %v1217 = vunpack.c.h.b16 %v1151
        %v1218 = vunpack.c.l.b16 %v1152
        %v1219 = vunpack.c.h.b16 %v1152
        %v1220 = vunpack.c.l.b16 %v1153
        %v1221 = vunpack.c.h.b16 %v1153
        %v1222 = vunpack.c.l.b16 %v1154
        %v1223 = vunpack.c.h.b16 %v1154
        %v1224 = vunpack.c.l.b16 %v1155
        %v1225 = vunpack.c.h.b16 %v1155
        %v1226 = vunpack.c.l.b16 %v1156
        %v1227 = vunpack.c.h.b16 %v1156
        %v1228 = vunpack.c.l.b16 %v1157
        %v1229 = vunpack.c.h.b16 %v1157
        %v1230 = vunpack.c.l.b16 %v1158
        %v1231 = vunpack.c.h.b16 %v1158
        %v1232 = vunpack.c.l.b16 %v1159
        %v1233 = vunpack.c.h.b16 %v1159
        %v1234 = vunpack.c.l.b16 %v1160
        %v1235 = vunpack.c.h.b16 %v1160
        %v1236 = vunpack.c.l.b16 %v1161
        %v1237 = vunpack.c.h.b16 %v1161
        %v1238 = vunpack.c.l.b16 %v1162
        %v1239 = vunpack.c.h.b16 %v1162
        %v1240 = vunpack.c.l.b16 %v1163
        %v1241 = vunpack.c.h.b16 %v1163
        %v1242 = vunpack.c.l.b16 %v1164
        %v1243 = vunpack.c.h.b16 %v1164
        %v1244 = vunpack.c.l.b16 %v1165
        %v1245 = vunpack.c.h.b16 %v1165
        %v1246 = vunpack.c.l.b16 %v1166
        %v1247 = vunpack.c.h.b16 %v1166
        %v1248 = vunpack.c.l.b16 %v1167
        %v1249 = vunpack.c.h.b16 %v1167
        %v1250 = vunpack.c.l.b16 %v1168
        %v1251 = vunpack.c.h.b16 %v1168
        %v1252 = vunpack.c.l.b16 %v1169
        %v1253 = vunpack.c.h.b16 %v1169
        %v1254 = vunpack.c.l.b16 %v1170
        %v1255 = vunpack.c.h.b16 %v1170
        %v1256 = vunpack.c.l.b16 %v1171
        %v1257 = vunpack.c.h.b16 %v1171
        %v1258 = vunpack.c.l.b16 %v1172
        %v1259 = vunpack.c.h.b16 %v1172
        %v1260 = vunpack.c.l.b16 %v1173
        %v1261 = vunpack.c.h.b16 %v1173
        %v1262 = vunpack.c.l.b16 %v1174
        %v1263 = vunpack.c.h.b16 %v1174
        %v1264 = vunpack.c.l.b16 %v1175
        %v1265 = vunpack.c.h.b16 %v1175
        %v1266 = vunpack.c.l.b16 %v1176
        %v1267 = vunpack.c.h.b16 %v1176
        %v1268 = vunpack.c.l.b16 %v1177
        %v1269 = vunpack.c.h.b16 %v1177
        %v1270 = vunpack.c.l.b16 %v1178
        %v1271 = vunpack.c.h.b16 %v1178
        %v1272 = vunpack.c.l.b16 %v1179
        %v1273 = vunpack.c.h.b16 %v1179
        %v1274 = vunpack.c.l.b16 %v1180
        %v1275 = vunpack.c.h.b16 %v1180
        %v1276 = vunpack.c.l.b16 %v1181
        %v1277 = vunpack.c.h.b16 %v1181
        %v1278 = vpack.c.b16 %v1216, %v1214
        %v1279 = vpack.c.b16 %v1217, %v1215
        %v1280 = vpack.c.b16 %v1220, %v1218
        %v1281 = vpack.c.b16 %v1221, %v1219
        %v1282 = vpack.c.b16 %v1224, %v1222
        %v1283 = vpack.c.b16 %v1225, %v1223
        %v1284 = vpack.c.b16 %v1228, %v1226
        %v1285 = vpack.c.b16 %v1229, %v1227
        %v1286 = vpack.c.b16 %v1232, %v1230
        %v1287 = vpack.c.b16 %v1233, %v1231
        %v1288 = vpack.c.b16 %v1236, %v1234
        %v1289 = vpack.c.b16 %v1237, %v1235
        %v1290 = vpack.c.b16 %v1240, %v1238
        %v1291 = vpack.c.b16 %v1241, %v1239
        %v1292 = vpack.c.b16 %v1244, %v1242
        %v1293 = vpack.c.b16 %v1245, %v1243
        %v1294 = vpack.c.b16 %v1248, %v1246
        %v1295 = vpack.c.b16 %v1249, %v1247
        %v1296 = vpack.c.b16 %v1252, %v1250
        %v1297 = vpack.c.b16 %v1253, %v1251
        %v1298 = vpack.c.b16 %v1256, %v1254
        %v1299 = vpack.c.b16 %v1257, %v1255
        %v1300 = vpack.c.b16 %v1260, %v1258
        %v1301 = vpack.c.b16 %v1261, %v1259
        %v1302 = vpack.c.b16 %v1264, %v1262
        %v1303 = vpack.c.b16 %v1265, %v1263
        %v1304 = vpack.c.b16 %v1268, %v1266
        %v1305 = vpack.c.b16 %v1269, %v1267
        %v1306 = vpack.c.b16 %v1272, %v1270
        %v1307 = vpack.c.b16 %v1273, %v1271
        %v1308 = vpack.c.b16 %v1276, %v1274
        %v1309 = vpack.c.b16 %v1277, %v1275
        %1342 = vmatprep.subr.bf16.mxu0 %v1279
        %1343 = vmatpush1.bf16.msra.mxu0 %v1278
        %1344 = vmatprep.subr.bf16.mxu0 %v1281
        %1345 = vmatpush1.bf16.msra.mxu0 %v1280
        %1346 = vmatprep.subr.bf16.mxu0 %v1283
        %1347 = vmatpush1.bf16.msra.mxu0 %v1282
        %1348 = vmatprep.subr.bf16.mxu0 %v1285
        %1349 = vmatpush1.bf16.msra.mxu0 %v1284
        %1350 = vmatprep.subr.bf16.mxu0 %v1287
        %1351 = vmatpush1.bf16.msra.mxu0 %v1286
        %1352 = vmatprep.subr.bf16.mxu0 %v1289
        %1353 = vmatpush1.bf16.msra.mxu0 %v1288
        %1354 = vmatprep.subr.bf16.mxu0 %v1291
        %1355 = vmatpush1.bf16.msra.mxu0 %v1290
        %1356 = vmatprep.subr.bf16.mxu0 %v1293
        %1357 = vmatpush1.bf16.msra.mxu0 %v1292
        %1358 = vmatprep.subr.bf16.mxu0 %v1295
        %1359 = vmatpush1.bf16.msra.mxu0 %v1294
        %1360 = vmatprep.subr.bf16.mxu0 %v1297
        %1361 = vmatpush1.bf16.msra.mxu0 %v1296
        %1362 = vmatprep.subr.bf16.mxu0 %v1299
        %1363 = vmatpush1.bf16.msra.mxu0 %v1298
        %1364 = vmatprep.subr.bf16.mxu0 %v1301
        %1365 = vmatpush1.bf16.msra.mxu0 %v1300
        %1366 = vmatprep.subr.bf16.mxu0 %v1303
        %1367 = vmatpush1.bf16.msra.mxu0 %v1302
        %1368 = vmatprep.subr.bf16.mxu0 %v1305
        %1369 = vmatpush1.bf16.msra.mxu0 %v1304
        %1370 = vmatprep.subr.bf16.mxu0 %v1307
        %1371 = vmatpush1.bf16.msra.mxu0 %v1306
        %1372 = vmatprep.subr.bf16.mxu0 %v1309
        %1373 = vmatpush1.bf16.msra.mxu0 %v1308
        %1374 = vmatprep.mubr.bf16.mxu0 %v905
        %1375 = vmatmul.mubr.bf16.gmra.mrb[0].mxu0 %v904
        %v1376 = vpop.f32.mrb[0].mxu0
        %v1377 = vadd.f32 0.0, %v1376
        %v1378 = vpop.f32.mrb[0].mxu0
        %v1379 = vadd.f32 0.0, %v1378
        %v1380 = vpop.f32.mrb[0].mxu0
        %v1381 = vadd.f32 0.0, %v1380
        %v1382 = vpop.f32.mrb[0].mxu0
        %v1383 = vadd.f32 0.0, %v1382
        %1384 = vdwg.mxu0
        %vm1389 = vcmask 1040384
        %v1390 = vrot.slane %v1377, 7
        %v1391 = vrot.slane %v1379, 7
        %v1392 = vrot.slane %v1381, 7
        %v1393 = vsel %vm1389, %v1390, %v1392
        %v1394 = vrot.slane %v1383, 7
        %v1395 = vsel %vm1389, %v1391, %v1394
        %v1400 = vadd.f32 %v1146, %v1390
        %v1401 = vadd.f32 %v1147, %v1391
        %v1402 = vadd.f32 %v1148, %v1393
        %v1403 = vadd.f32 %v1149, %v1395
        %1404 = vst [vmem:[#allocation2] sm:$0xfe] %v1400
        %1405 = vst [vmem:[#allocation2 + $0x8] sm:$0xfe] %v1401
        %1406 = vst [vmem:[#allocation2 + $0x10] sm:$0xff] %v1402
        %1407 = vst [vmem:[#allocation2 + $0x18] sm:$0xff] %v1403
        %v1408 = vld [vmem:[#allocation2] sm:$0xff]
        %v1409 = vld [vmem:[#allocation2 + $0x8] sm:$0xff]
        %v1410 = vld [vmem:[#allocation2 + $0x10] sm:$0x7f]
        %v1411 = vld [vmem:[#allocation2 + $0x18] sm:$0x7f]
        %s1412 = scalar_lea.vmem [#allocation7], 512
        %v1413 = vld [vmem:[%s1412] sm:$0xff]
        %v1414 = vld [vmem:[%s1412 + $0x8] sm:$0xff]
        %v1415 = vld [vmem:[%s1412 + $0x10] sm:$0xff]
        %v1416 = vld [vmem:[%s1412 + $0x18] sm:$0xff]
        %v1417 = vld [vmem:[%s1412 + $0x20] sm:$0xff]
        %v1418 = vld [vmem:[%s1412 + $0x28] sm:$0xff]
        %v1419 = vld [vmem:[%s1412 + $0x30] sm:$0xff]
        %v1420 = vld [vmem:[%s1412 + $0x38] sm:$0xff]
        %v1421 = vld [vmem:[%s1412 + $0x40] sm:$0xff]
        %v1422 = vld [vmem:[%s1412 + $0x48] sm:$0xff]
        %v1423 = vld [vmem:[%s1412 + $0x50] sm:$0xff]
        %v1424 = vld [vmem:[%s1412 + $0x58] sm:$0xff]
        %v1425 = vld [vmem:[%s1412 + $0x60] sm:$0xff]
        %v1426 = vld [vmem:[%s1412 + $0x68] sm:$0xff]
        %v1427 = vld [vmem:[%s1412 + $0x70] sm:$0xff]
        %v1428 = vld [vmem:[%s1412 + $0x78] sm:$0xff]
        %v1429 = vld [vmem:[%s1412 + $0x80] sm:$0xff]
        %v1430 = vld [vmem:[%s1412 + $0x88] sm:$0xff]
        %v1431 = vld [vmem:[%s1412 + $0x90] sm:$0xff]
        %v1432 = vld [vmem:[%s1412 + $0x98] sm:$0xff]
        %v1433 = vld [vmem:[%s1412 + $0xa0] sm:$0xff]
        %v1434 = vld [vmem:[%s1412 + $0xa8] sm:$0xff]
        %v1435 = vld [vmem:[%s1412 + $0xb0] sm:$0xff]
        %v1436 = vld [vmem:[%s1412 + $0xb8] sm:$0xff]
        %v1437 = vld [vmem:[%s1412 + $0xc0] sm:$0xff]
        %v1438 = vld [vmem:[%s1412 + $0xc8] sm:$0xff]
        %v1439 = vld [vmem:[%s1412 + $0xd0] sm:$0xff]
        %v1440 = vld [vmem:[%s1412 + $0xd8] sm:$0xff]
        %v1441 = vld [vmem:[%s1412 + $0xe0] sm:$0xff]
        %v1442 = vld [vmem:[%s1412 + $0xe8] sm:$0xff]
        %v1443 = vld [vmem:[%s1412 + $0xf0] sm:$0xff]
        %v1444 = vld [vmem:[%s1412 + $0xf8] sm:$0xff]
        %v1446 = vshrl.u32 %v904, 16
        %v1448 = vshll.u32 %v904, 16
        %v1450 = vrot.slane %v1448, 1
        %v1451 = vor.u32 %v1446, %v1450
        %v1453 = vshrl.u32 %v905, 16
        %v1455 = vshll.u32 %v905, 16
        %v1457 = vrot.slane %v1455, 1
        %v1458 = vor.u32 %v1453, %v1457
        %v1493 = vunpack.c.l.b16 %v1413
        %v1494 = vunpack.c.h.b16 %v1413
        %v1495 = vunpack.c.l.b16 %v1414
        %v1496 = vunpack.c.h.b16 %v1414
        %v1497 = vunpack.c.l.b16 %v1415
        %v1498 = vunpack.c.h.b16 %v1415
        %v1499 = vunpack.c.l.b16 %v1416
        %v1500 = vunpack.c.h.b16 %v1416
        %v1501 = vunpack.c.l.b16 %v1417
        %v1502 = vunpack.c.h.b16 %v1417
        %v1503 = vunpack.c.l.b16 %v1418
        %v1504 = vunpack.c.h.b16 %v1418
        %v1505 = vunpack.c.l.b16 %v1419
        %v1506 = vunpack.c.h.b16 %v1419
        %v1507 = vunpack.c.l.b16 %v1420
        %v1508 = vunpack.c.h.b16 %v1420
        %v1509 = vunpack.c.l.b16 %v1421
        %v1510 = vunpack.c.h.b16 %v1421
        %v1511 = vunpack.c.l.b16 %v1422
        %v1512 = vunpack.c.h.b16 %v1422
        %v1513 = vunpack.c.l.b16 %v1423
        %v1514 = vunpack.c.h.b16 %v1423
        %v1515 = vunpack.c.l.b16 %v1424
        %v1516 = vunpack.c.h.b16 %v1424
        %v1517 = vunpack.c.l.b16 %v1425
        %v1518 = vunpack.c.h.b16 %v1425
        %v1519 = vunpack.c.l.b16 %v1426
        %v1520 = vunpack.c.h.b16 %v1426
        %v1521 = vunpack.c.l.b16 %v1427
        %v1522 = vunpack.c.h.b16 %v1427
        %v1523 = vunpack.c.l.b16 %v1428
        %v1524 = vunpack.c.h.b16 %v1428
        %v1525 = vunpack.c.l.b16 %v1429
        %v1526 = vunpack.c.h.b16 %v1429
        %v1527 = vunpack.c.l.b16 %v1430
        %v1528 = vunpack.c.h.b16 %v1430
        %v1529 = vunpack.c.l.b16 %v1431
        %v1530 = vunpack.c.h.b16 %v1431
        %v1531 = vunpack.c.l.b16 %v1432
        %v1532 = vunpack.c.h.b16 %v1432
        %v1533 = vunpack.c.l.b16 %v1433
        %v1534 = vunpack.c.h.b16 %v1433
        %v1535 = vunpack.c.l.b16 %v1434
        %v1536 = vunpack.c.h.b16 %v1434
        %v1537 = vunpack.c.l.b16 %v1435
        %v1538 = vunpack.c.h.b16 %v1435
        %v1539 = vunpack.c.l.b16 %v1436
        %v1540 = vunpack.c.h.b16 %v1436
        %v1541 = vunpack.c.l.b16 %v1437
        %v1542 = vunpack.c.h.b16 %v1437
        %v1543 = vunpack.c.l.b16 %v1438
        %v1544 = vunpack.c.h.b16 %v1438
        %v1545 = vunpack.c.l.b16 %v1439
        %v1546 = vunpack.c.h.b16 %v1439
        %v1547 = vunpack.c.l.b16 %v1440
        %v1548 = vunpack.c.h.b16 %v1440
        %v1549 = vunpack.c.l.b16 %v1441
        %v1550 = vunpack.c.h.b16 %v1441
        %v1551 = vunpack.c.l.b16 %v1442
        %v1552 = vunpack.c.h.b16 %v1442
        %v1553 = vunpack.c.l.b16 %v1443
        %v1554 = vunpack.c.h.b16 %v1443
        %v1555 = vunpack.c.l.b16 %v1444
        %v1556 = vunpack.c.h.b16 %v1444
        %v1557 = vpack.c.b16 %v1495, %v1493
        %v1558 = vpack.c.b16 %v1496, %v1494
        %v1559 = vpack.c.b16 %v1499, %v1497
        %v1560 = vpack.c.b16 %v1500, %v1498
        %v1561 = vpack.c.b16 %v1503, %v1501
        %v1562 = vpack.c.b16 %v1504, %v1502
        %v1563 = vpack.c.b16 %v1507, %v1505
        %v1564 = vpack.c.b16 %v1508, %v1506
        %v1565 = vpack.c.b16 %v1511, %v1509
        %v1566 = vpack.c.b16 %v1512, %v1510
        %v1567 = vpack.c.b16 %v1515, %v1513
        %v1568 = vpack.c.b16 %v1516, %v1514
        %v1569 = vpack.c.b16 %v1519, %v1517
        %v1570 = vpack.c.b16 %v1520, %v1518
        %v1571 = vpack.c.b16 %v1523, %v1521
        %v1572 = vpack.c.b16 %v1524, %v1522
        %v1573 = vpack.c.b16 %v1527, %v1525
        %v1574 = vpack.c.b16 %v1528, %v1526
        %v1575 = vpack.c.b16 %v1531, %v1529
        %v1576 = vpack.c.b16 %v1532, %v1530
        %v1577 = vpack.c.b16 %v1535, %v1533
        %v1578 = vpack.c.b16 %v1536, %v1534
        %v1579 = vpack.c.b16 %v1539, %v1537
        %v1580 = vpack.c.b16 %v1540, %v1538
        %v1581 = vpack.c.b16 %v1543, %v1541
        %v1582 = vpack.c.b16 %v1544, %v1542
        %v1583 = vpack.c.b16 %v1547, %v1545
        %v1584 = vpack.c.b16 %v1548, %v1546
        %v1585 = vpack.c.b16 %v1551, %v1549
        %v1586 = vpack.c.b16 %v1552, %v1550
        %v1587 = vpack.c.b16 %v1555, %v1553
        %v1588 = vpack.c.b16 %v1556, %v1554
        %1621 = vmatprep.subr.bf16.mxu0 %v1558
        %1622 = vmatpush1.bf16.msra.mxu0 %v1557
        %1623 = vmatprep.subr.bf16.mxu0 %v1560
        %1624 = vmatpush1.bf16.msra.mxu0 %v1559
        %1625 = vmatprep.subr.bf16.mxu0 %v1562
        %1626 = vmatpush1.bf16.msra.mxu0 %v1561
        %1627 = vmatprep.subr.bf16.mxu0 %v1564
        %1628 = vmatpush1.bf16.msra.mxu0 %v1563
        %1629 = vmatprep.subr.bf16.mxu0 %v1566
        %1630 = vmatpush1.bf16.msra.mxu0 %v1565
        %1631 = vmatprep.subr.bf16.mxu0 %v1568
        %1632 = vmatpush1.bf16.msra.mxu0 %v1567
        %1633 = vmatprep.subr.bf16.mxu0 %v1570
        %1634 = vmatpush1.bf16.msra.mxu0 %v1569
        %1635 = vmatprep.subr.bf16.mxu0 %v1572
        %1636 = vmatpush1.bf16.msra.mxu0 %v1571
        %1637 = vmatprep.subr.bf16.mxu0 %v1574
        %1638 = vmatpush1.bf16.msra.mxu0 %v1573
        %1639 = vmatprep.subr.bf16.mxu0 %v1576
        %1640 = vmatpush1.bf16.msra.mxu0 %v1575
        %1641 = vmatprep.subr.bf16.mxu0 %v1578
        %1642 = vmatpush1.bf16.msra.mxu0 %v1577
        %1643 = vmatprep.subr.bf16.mxu0 %v1580
        %1644 = vmatpush1.bf16.msra.mxu0 %v1579
        %1645 = vmatprep.subr.bf16.mxu0 %v1582
        %1646 = vmatpush1.bf16.msra.mxu0 %v1581
        %1647 = vmatprep.subr.bf16.mxu0 %v1584
        %1648 = vmatpush1.bf16.msra.mxu0 %v1583
        %1649 = vmatprep.subr.bf16.mxu0 %v1586
        %1650 = vmatpush1.bf16.msra.mxu0 %v1585
        %1651 = vmatprep.subr.bf16.mxu0 %v1588
        %1652 = vmatpush1.bf16.msra.mxu0 %v1587
        %1653 = vmatprep.mubr.bf16.mxu0 %v1458
        %1654 = vmatmul.mubr.bf16.gmra.mrb[0].mxu0 %v1451
        %v1655 = vpop.f32.mrb[0].mxu0
        %v1656 = vadd.f32 0.0, %v1655
        %v1657 = vpop.f32.mrb[0].mxu0
        %v1658 = vadd.f32 0.0, %v1657
        %v1659 = vpop.f32.mrb[0].mxu0
        %v1660 = vadd.f32 0.0, %v1659
        %v1661 = vpop.f32.mrb[0].mxu0
        %v1662 = vadd.f32 0.0, %v1661
        %1663 = vdwg.mxu0
        %v1664 = vadd.f32 %v1408, %v1656
        %v1665 = vadd.f32 %v1409, %v1658
        %v1666 = vadd.f32 %v1410, %v1660
        %v1667 = vadd.f32 %v1411, %v1662
        %1668 = vst [vmem:[#allocation2] sm:$0xff] %v1664
        %1669 = vst [vmem:[#allocation2 + $0x8] sm:$0xff] %v1665
        %1670 = vst [vmem:[#allocation2 + $0x10] sm:$0x7f] %v1666
        %1671 = vst [vmem:[#allocation2 + $0x18] sm:$0x7f] %v1667
        %v1672 = vld [vmem:[#allocation2] sm:$0xff]
        %v1673 = vld [vmem:[#allocation2 + $0x8] sm:$0xff]
        %v1674 = vld [vmem:[#allocation2 + $0x10] sm:$0xff]
        %v1675 = vld [vmem:[#allocation2 + $0x18] sm:$0xff]
        %v1676 = vld [vmem:[%s5] sm:$0x3]
        %v1678 = vlaneseq
        %v1679 = vshrl.u32 %v1678, 7
        %v1680 = vsub.s32 0, %v1679
        %v1681 = vrot.slane %v1676, %v1680
        %v1682 = vlaneseq
        %v1683 = vshrl.u32 %v1682, 7
        %v1684 = vsub.s32 1, %v1683
        %v1685 = vrot.slane %v1676, %v1684
        %v1688 = vmul.f32 %v1672, %v1681
        %v1689 = vmul.f32 %v1673, %v1685
        %v1690 = vmul.f32 %v1674, %v1681
        %v1691 = vmul.f32 %v1675, %v1685
        %v1692 = vld [vmem:[%s6] sm:$0x3]
        %v1694 = vlaneseq
        %v1695 = vshrl.u32 %v1694, 7
        %v1696 = vsub.s32 0, %v1695
        %v1697 = vrot.slane %v1692, %v1696
        %v1698 = vlaneseq
        %v1699 = vshrl.u32 %v1698, 7
        %v1700 = vsub.s32 1, %v1699
        %v1701 = vrot.slane %v1692, %v1700
        %v1704 = vadd.f32 %v1688, %v1697
        %v1705 = vadd.f32 %v1689, %v1701
        %v1706 = vadd.f32 %v1690, %v1697
        %v1707 = vadd.f32 %v1691, %v1701
        %v1708 = vld [vmem:[#allocation9] sm:$0xff]
        %v1709 = vld [vmem:[#allocation9 + $0x8] sm:$0xff]
        %v1710 = vld [vmem:[#allocation9 + $0x10] sm:$0xff]
        %v1711 = vld [vmem:[#allocation9 + $0x18] sm:$0xff]
        %v1712 = vld [vmem:[#allocation9 + $0x20] sm:$0xff]
        %v1713 = vld [vmem:[#allocation9 + $0x28] sm:$0xff]
        %v1714 = vld [vmem:[#allocation9 + $0x30] sm:$0xff]
        %v1715 = vld [vmem:[#allocation9 + $0x38] sm:$0xff]
        %v1716 = vld [vmem:[#allocation9 + $0x40] sm:$0xff]
        %v1717 = vld [vmem:[#allocation9 + $0x48] sm:$0xff]
        %v1718 = vld [vmem:[#allocation9 + $0x50] sm:$0xff]
        %v1719 = vld [vmem:[#allocation9 + $0x58] sm:$0xff]
        %v1720 = vld [vmem:[#allocation9 + $0x60] sm:$0xff]
        %v1721 = vld [vmem:[#allocation9 + $0x68] sm:$0xff]
        %v1722 = vld [vmem:[#allocation9 + $0x70] sm:$0xff]
        %v1723 = vld [vmem:[#allocation9 + $0x78] sm:$0xff]
        %v1724 = vld [vmem:[%s8] sm:$0x3]
        %v1726 = vlaneseq
        %v1727 = vshrl.u32 %v1726, 7
        %v1728 = vsub.s32 0, %v1727
        %v1729 = vrot.slane %v1724, %v1728
        %v1730 = vlaneseq
        %v1731 = vshrl.u32 %v1730, 7
        %v1732 = vsub.s32 1, %v1731
        %v1733 = vrot.slane %v1724, %v1732
        %v1752 = vunpack.c.l.b16 %v1708
        %v1753 = vunpack.c.h.b16 %v1708
        %v1754 = vunpack.c.l.b16 %v1709
        %v1755 = vunpack.c.h.b16 %v1709
        %v1756 = vunpack.c.l.b16 %v1710
        %v1757 = vunpack.c.h.b16 %v1710
        %v1758 = vunpack.c.l.b16 %v1711
        %v1759 = vunpack.c.h.b16 %v1711
        %v1760 = vunpack.c.l.b16 %v1712
        %v1761 = vunpack.c.h.b16 %v1712
        %v1762 = vunpack.c.l.b16 %v1713
        %v1763 = vunpack.c.h.b16 %v1713
        %v1764 = vunpack.c.l.b16 %v1714
        %v1765 = vunpack.c.h.b16 %v1714
        %v1766 = vunpack.c.l.b16 %v1715
        %v1767 = vunpack.c.h.b16 %v1715
        %v1768 = vunpack.c.l.b16 %v1716
        %v1769 = vunpack.c.h.b16 %v1716
        %v1770 = vunpack.c.l.b16 %v1717
        %v1771 = vunpack.c.h.b16 %v1717
        %v1772 = vunpack.c.l.b16 %v1718
        %v1773 = vunpack.c.h.b16 %v1718
        %v1774 = vunpack.c.l.b16 %v1719
        %v1775 = vunpack.c.h.b16 %v1719
        %v1776 = vunpack.c.l.b16 %v1720
        %v1777 = vunpack.c.h.b16 %v1720
        %v1778 = vunpack.c.l.b16 %v1721
        %v1779 = vunpack.c.h.b16 %v1721
        %v1780 = vunpack.c.l.b16 %v1722
        %v1781 = vunpack.c.h.b16 %v1722
        %v1782 = vunpack.c.l.b16 %v1723
        %v1783 = vunpack.c.h.b16 %v1723
        %v1784 = vpack.c.b16 %v1754, %v1752
        %v1785 = vpack.c.b16 %v1755, %v1753
        %v1786 = vpack.c.b16 %v1758, %v1756
        %v1787 = vpack.c.b16 %v1759, %v1757
        %v1788 = vpack.c.b16 %v1762, %v1760
        %v1789 = vpack.c.b16 %v1763, %v1761
        %v1790 = vpack.c.b16 %v1766, %v1764
        %v1791 = vpack.c.b16 %v1767, %v1765
        %v1792 = vpack.c.b16 %v1770, %v1768
        %v1793 = vpack.c.b16 %v1771, %v1769
        %v1794 = vpack.c.b16 %v1774, %v1772
        %v1795 = vpack.c.b16 %v1775, %v1773
        %v1796 = vpack.c.b16 %v1778, %v1776
        %v1797 = vpack.c.b16 %v1779, %v1777
        %v1798 = vpack.c.b16 %v1782, %v1780
        %v1799 = vpack.c.b16 %v1783, %v1781
        %1816 = vmatprep.subr.bf16.mxu0 %v1785
        %1817 = vmatpush1.bf16.msra.mxu0 %v1784
        %1818 = vmatprep.subr.bf16.mxu0 %v1787
        %1819 = vmatpush1.bf16.msra.mxu0 %v1786
        %1820 = vmatprep.subr.bf16.mxu0 %v1789
        %1821 = vmatpush1.bf16.msra.mxu0 %v1788
        %1822 = vmatprep.subr.bf16.mxu0 %v1791
        %1823 = vmatpush1.bf16.msra.mxu0 %v1790
        %1824 = vmatprep.subr.bf16.mxu0 %v1793
        %1825 = vmatpush1.bf16.msra.mxu0 %v1792
        %1826 = vmatprep.subr.bf16.mxu0 %v1795
        %1827 = vmatpush1.bf16.msra.mxu0 %v1794
        %1828 = vmatprep.subr.bf16.mxu0 %v1797
        %1829 = vmatpush1.bf16.msra.mxu0 %v1796
        %1830 = vmatprep.subr.bf16.mxu0 %v1799
        %1831 = vmatpush1.bf16.msra.mxu0 %v1798
        %1832 = vmatprep.subr.bf16.mxu0 0
        %1833 = vmatpush1.bf16.msra.mxu0 0
        %1834 = vmatprep.subr.bf16.mxu0 0
        %1835 = vmatpush1.bf16.msra.mxu0 0
        %1836 = vmatprep.subr.bf16.mxu0 0
        %1837 = vmatpush1.bf16.msra.mxu0 0
        %1838 = vmatprep.subr.bf16.mxu0 0
        %1839 = vmatpush1.bf16.msra.mxu0 0
        %1840 = vmatprep.subr.bf16.mxu0 0
        %1841 = vmatpush1.bf16.msra.mxu0 0
        %1842 = vmatprep.subr.bf16.mxu0 0
        %1843 = vmatpush1.bf16.msra.mxu0 0
        %1844 = vmatprep.subr.bf16.mxu0 0
        %1845 = vmatpush1.bf16.msra.mxu0 0
        %1846 = vmatprep.subr.bf16.mxu0 0
        %1847 = vmatpush1.bf16.msra.mxu0 0
        %1848 = vmatprep.mubr.bf16.mxu0 0
        %1849 = vmatmul.mubr.bf16.gmra.mrb[0].mxu0 %v461
        %v1850 = vpop.f32.mrb[0].mxu0
        %v1851 = vadd.f32 %v1729, %v1850
        %v1852 = vpop.f32.mrb[0].mxu0
        %v1853 = vadd.f32 %v1733, %v1852
        %v1854 = vpop.f32.mrb[0].mxu0
        %v1855 = vadd.f32 %v1729, %v1854
        %v1856 = vpop.f32.mrb[0].mxu0
        %v1857 = vadd.f32 %v1733, %v1856
        %1858 = vdwg.mxu0
        %v1859 = vadd.f32 %v1851, %v1704
        %v1860 = vadd.f32 %v1853, %v1705
        %v1861 = vadd.f32 %v1855, %v1706
        %v1862 = vadd.f32 %v1857, %v1707
        %vm1863 = vcmp.ge.f32.partialorder %v1859, 0.0
        %vm1864 = vcmp.ge.f32.partialorder %v1860, 0.0
        %vm1865 = vcmp.ge.f32.partialorder %v1861, 0.0
        %vm1866 = vcmp.ge.f32.partialorder %v1862, 0.0
        %v1867 = vmul.f32 %v895, %v1859
        %v1868 = vmul.f32 %v895, %v1860
        %v1869 = vmul.f32 %v895, %v1861
        %v1870 = vmul.f32 %v895, %v1862
        %v1871 = vsel %vm1863, %v1859, %v1867
        %v1872 = vsel %vm1864, %v1860, %v1868
        %v1873 = vsel %vm1865, %v1861, %v1869
        %v1874 = vsel %vm1866, %v1862, %v1870
        %1875 = vst [vmem:[%s397] sm:$0xff] %v1871
        %1876 = vst [vmem:[%s397 + $0x8] sm:$0xff] %v1872
        %1877 = vst [vmem:[%s397 + $0x10] sm:$0xff] %v1873
        %1878 = vst [vmem:[%s397 + $0x18] sm:$0xff] %v1874
        %s1879 = sand.u32 %s250, 1
        %s1880 = scalar_lea.sflag [#allocation6], %s1879
        %s1881 = sand.u32 %s250, 1
        %s1882 = smul.addr %s1881, 32
        %s1883 = scalar_lea.vmem [#allocation10], %s1882
        // Predicated region
        $region73: #{tpu_custom_call.1} parent=59 // pred_check
          %p1884 = pneg %p260
        $region74: #{tpu_custom_call.1} parent=59 // pred_check_branch
          %1886 = sbr.rel (%p1884) target = $region76
        $region75: #{tpu_custom_call.1} parent=59 // pred_region
          %s1888 = ssub.s32 512, 512
          %1889 = vsyncadd %s1880, %s1888
          %s1890 = smul.addr %s27, 4
          %s1891 = smul.addr %s1890, 128
          %s1892 = scalar_lea.hbm %s10, %s1891
          %s1893 = sshll.u32 %s1883, 4
          %s1894 = int_to_ptr.vmem [resolvable:$true] %s1893
          %1899 = dma.vmem_to_hbm [thread:$0]  %s1894, 512, %s1892, %s1880, 256, 256, 16
        $region76: #{tpu_custom_call.1} parent=59 // pred_fallthru
          _
      $region60: #{tpu_custom_call.1} parent=5 // pred_fallthru
        _
      %p1900 = scmp.le.s32.totalorder 2, %s22
      // Predicated region
      $region77: #{tpu_custom_call.1} parent=5 // pred_check
        %p1901 = pneg %p1900
      $region78: #{tpu_custom_call.1} parent=5 // pred_check_branch
        %1903 = sbr.rel (%p1901) target = $region80
      $region79: #{tpu_custom_call.1} parent=5 // pred_region
        %s1904 = ssub.s32 %s22, 2
        // Predicated region
        $region81: #{tpu_custom_call.1} parent=79 // pred_check
          %p1905 = pneg %p266
        $region82: #{tpu_custom_call.1} parent=79 // pred_check_branch
          %1907 = sbr.rel (%p1905) target = $region84
        $region83: #{tpu_custom_call.1} parent=79 // pred_region
          %s1908 = sand.u32 %s251, 1
          %s1909 = scalar_lea.sflag [#allocation6], %s1908
          %s1910 = sand.u32 %s251, 1
          %s1911 = smul.addr %s1910, 32
          %s1912 = scalar_lea.vmem [#allocation10], %s1911
          %1913 = dma.done %s1909, 512
        $region84: #{tpu_custom_call.1} parent=79 // pred_fallthru
          _
      $region80: #{tpu_custom_call.1} parent=5 // pred_fallthru
        _
    $region6: #{tpu_custom_call.1} parent=1 // loop_footer
      %s26 = sadd.s32 1, %s22
    $region7: #{tpu_custom_call.1} parent=1 // loop_footer_branch
      %21 = sbr.rel target = $region3
    $region8: #{tpu_custom_call.1} parent=1 // loop_exit
      _
    %1914 = vsyncpa [#allocation5], 1
    %s1915 = scalar_lea.sflag [#allocation5], 1
    %1916 = vsyncpa %s1915, 1
    %1917 = vsyncpa [#allocation8], 1
    %1918 = vsyncpa [#allocation6], 1
    %s1919 = scalar_lea.sflag [#allocation6], 1
    %1920 = vsyncpa %s1919, 1

</llo_original>
